<compile_context>
chip_gen: v5e
topology: v5e:2x2
jax: 0.10.0
libtpu: 0.0.40
codegen_flags: <defaults>
</compile_context>

<pallas_src>
import functools
import math

import jax
import jax.numpy as jnp
from jax import lax
from jax.experimental import pallas as pl
from jax.experimental.pallas import tpu as pltpu


# ---------------------------------------------------------------------------
# Fused kernel: conv3x3 -> per-head SDPA -> residual -> GroupNorm, per batch.
# ---------------------------------------------------------------------------
def _fused_self_attention_kernel(xpf_ref, w_ref, gamma_ref, beta_ref, o_ref,
                                 x9_ref, qkv_ref, *, H, W, C, nheads, eps,
                                 compute_dtype):
    Wp = W + 2                  # padded row length
    L = H * Wp                  # lane-flattened spatial length (incl. junk lanes)
    S = H * W                   # true spatial size (= SDPA embedding dim)
    hl = C // nheads
    cdt = compute_dtype

    # Column mask generated in-kernel (no HBM operand / DMA): 1.0 on the W real
    # lanes of each flattened spatial row, 0.0 on the 2 junk lanes.
    col = lax.broadcasted_iota(jnp.int32, (1, L), 1)
    mask = ((col % Wp) < W).astype(jnp.float32)

    # --- 3x3 conv (padding=1, no bias) for ALL 3*C output channels at once.
    # Stack the 9 shifted tap slabs into one (9C, L) scratch: the unavoidable
    # lane-shift relayout and the cast to the MXU operand dtype are paid exactly
    # once.  Then a single (3C, 9C) @ (9C, L) matmul with f32 accumulation.
    for t in range(9):
        ky, kx = divmod(t, 3)
        off = ky * Wp + kx
        x9_ref[t * C:(t + 1) * C, :] = xpf_ref[0, :, off:off + L].astype(cdt)

    # Zero the junk lanes at the store so they never enter the QK^T contraction
    # or (via v) the attention output / GroupNorm statistics.
    qkv_ref[...] = jnp.dot(w_ref[...], x9_ref[...],
                           preferred_element_type=jnp.float32) * mask

    # --- per-head scaled dot-product attention.
    # PyTorch SDPA default scale = 1/sqrt(E) with E = H*W here.  The (hl, hl)
    # score matrices are tiny, so these matmuls stay in f32 with an exact
    # softmax normalisation (no approximation anywhere in this path).
    scale = 1.0 / math.sqrt(S)
    attn_heads = []
    for h in range(nheads):
        q = qkv_ref[h * hl:(h + 1) * hl, :]                        # (hl, L)
        k = qkv_ref[C + h * hl:C + (h + 1) * hl, :]                # (hl, L)
        v = qkv_ref[2 * C + h * hl:2 * C + (h + 1) * hl, :]        # (hl, L)
        s = lax.dot_general(q, k, (((1,), (1,)), ((), ())),
                            preferred_element_type=jnp.float32) * scale
        s = s - jnp.max(s, axis=-1, keepdims=True)
        p = jnp.exp(s)
        p = p / jnp.sum(p, axis=-1, keepdims=True)
        attn_heads.append(jnp.dot(p, v, preferred_element_type=jnp.float32))
    attn = attn_heads[0] if nheads == 1 else jnp.concatenate(attn_heads, axis=0)

    # --- residual add, read from the SAME resident padded-input block (offset
    # Wp+1 realigns it with the conv-output column layout).  Its junk lanes are
    # exact zeros (padding), and attn's junk lanes are zero because v was masked.
    xres = xpf_ref[0, :, Wp + 1:Wp + 1 + L]                        # (C, L)
    y = xres + attn

    # --- GroupNorm(num_groups == num_channels): per-channel stats over the S
    # real lanes.  Junk lanes of y are exact zeros, so plain full-row sums give
    # the masked statistics for free (var via E[y^2] - mean^2).
    inv_s = 1.0 / float(S)
    mean = jnp.sum(y, axis=-1, keepdims=True) * inv_s
    var = jnp.sum(y * y, axis=-1, keepdims=True) * inv_s - mean * mean
    o_ref[0] = (y - mean) * lax.rsqrt(var + eps) * gamma_ref[...] + beta_ref[...]


# ---------------------------------------------------------------------------
# One-time (parameter-load) weight regroup -- hoisted out of the forward path.
# ---------------------------------------------------------------------------
def prepare_conv_weight(w_conv, use_bf16_matmul=True):
    """(3C, C, 3, 3) OIHW -> (3C, 9C), columns tap-major (t = ky*3 + kx)."""
    OC, C, KH, KW = w_conv.shape
    w = jnp.asarray(w_conv, jnp.float32).transpose(0, 2, 3, 1).reshape(OC, KH * KW * C)
    return w.astype(jnp.bfloat16 if use_bf16_matmul else jnp.float32)


# ---------------------------------------------------------------------------
# Forward wrapper.
# ---------------------------------------------------------------------------
@functools.partial(jax.jit, static_argnames=("nheads", "eps", "use_bf16_matmul"))
def self_attention_forward(x, w_stack, gamma, beta, nheads, eps=1e-5,
                           use_bf16_matmul=True):
    B, C, H, W = x.shape
    assert C % nheads == 0
    Wp = W + 2
    L = H * Wp
    P = (H + 3) * Wp       # H padded by (1, 2): keeps every 3x3 tap slice in bounds
    cdt = jnp.bfloat16 if use_bf16_matmul else jnp.float32

    # NOTE: norm_in's output is dead in the reference forward (immediately
    # overwritten by the attention path), so its parameters are intentionally
    # unused here.  self.scale is likewise unused by the reference forward.

    # Single merged pad + free reshape: lane-flattened padded slab (B, C, P).
    xpf = jnp.pad(x, ((0, 0), (0, 0), (1, 2), (1, 1))).reshape(B, C, P)
    xpf = xpf.astype(jnp.float32)

    g = gamma.reshape(C, 1).astype(jnp.float32)
    b = beta.reshape(C, 1).astype(jnp.float32)
    w = w_stack.astype(cdt)

    kern = functools.partial(_fused_self_attention_kernel, H=H, W=W, C=C,
                             nheads=nheads, eps=eps, compute_dtype=cdt)
    out_pad = pl.pallas_call(
        kern,
        out_shape=jax.ShapeDtypeStruct((B, C, L), jnp.float32),
        grid=(B,),
        in_specs=[
            pl.BlockSpec((1, C, P), lambda bb: (bb, 0, 0)),          # padded input
            pl.BlockSpec((3 * C, 9 * C), lambda bb: (0, 0)),         # stacked conv weight (resident)
            pl.BlockSpec((C, 1), lambda bb: (0, 0)),                 # gamma (resident)
            pl.BlockSpec((C, 1), lambda bb: (0, 0)),                 # beta  (resident)
        ],
        out_specs=pl.BlockSpec((1, C, L), lambda bb: (bb, 0, 0)),
        scratch_shapes=[
            pltpu.VMEM((9 * C, L), cdt),          # stacked 3x3 tap slabs
            pltpu.VMEM((3 * C, L), jnp.float32),  # qkv (explicit, no vreg spill)
        ],
        compiler_params=pltpu.CompilerParams(
            dimension_semantics=("parallel",),
            vmem_limit_bytes=32 * 1024 * 1024),
    )(xpf, w, g, b)

    # Drop the 2 junk lanes per spatial row and restore NCHW.  (A fused consumer
    # could take the lane-padded (B, C, H, Wp) layout directly and skip this copy.)
    return out_pad.reshape(B, C, H, Wp)[:, :, :, :W]


# ---------------------------------------------------------------------------
# Pure-JAX reference (mirrors the PyTorch forward) for a correctness check.
# ---------------------------------------------------------------------------
def reference(x, w_conv, gamma, beta, nheads, eps=1e-5):
    B, C, H, W = x.shape
    S = H * W
    hl = C // nheads
    qkv = lax.conv_general_dilated(
        x, w_conv, window_strides=(1, 1), padding="SAME",
        dimension_numbers=("NCHW", "OIHW", "NCHW"),
        precision=lax.Precision.HIGHEST)
    q, k, v = jnp.split(qkv, 3, axis=1)
    q = q.reshape(B, nheads, hl, S)
    k = k.reshape(B, nheads, hl, S)
    v = v.reshape(B, nheads, hl, S)
    s = jnp.einsum("bnld,bnmd->bnlm", q, k,
                   precision=lax.Precision.HIGHEST) * (1.0 / math.sqrt(S))
    p = jax.nn.softmax(s, axis=-1)
    o = jnp.einsum("bnlm,bnmd->bnld", p, v,
                   precision=lax.Precision.HIGHEST).reshape(B, C, H, W)
    y = x + o
    mean = y.mean(axis=(2, 3), keepdims=True)
    var = y.var(axis=(2, 3), keepdims=True)
    y = (y - mean) / jnp.sqrt(var + eps)
    return y * gamma[None, :, None, None] + beta[None, :, None, None]


if __name__ == "__main__":
    B, C, H, W = 2, 16, 16, 16
    nheads = 2

    key = jax.random.PRNGKey(0)
    k_x, k_w, k_g, k_b = jax.random.split(key, 4)
    x = jax.random.normal(k_x, (B, C, H, W), dtype=jnp.float32)
    w_conv = 0.1 * jax.random.normal(k_w, (3 * C, C, 3, 3), dtype=jnp.float32)
    gamma = 1.0 + 0.1 * jax.random.normal(k_g, (C,), dtype=jnp.float32)
    beta = 0.1 * jax.random.normal(k_b, (C,), dtype=jnp.float32)

    ref = jax.block_until_ready(reference(x, w_conv, gamma, beta, nheads))

    # Exact path (f32 MXU operands): proves the kernel's semantics match the module.
    w_f32 = prepare_conv_weight(w_conv, use_bf16_matmul=False)
    out_f32 = jax.block_until_ready(
        self_attention_forward(x, w_f32, gamma, beta, nheads=nheads,
                               use_bf16_matmul=False))
    assert out_f32.shape == (B, C, H, W)
    err_f32 = float(jnp.max(jnp.abs(out_f32 - ref)))
    assert err_f32 < 1e-3, f"f32 path mismatch vs reference: max abs err = {err_f32}"

    # Default fast path (bf16 conv operands, f32 accumulation): tolerance headroom
    # is solely the bf16 rounding of the conv-matmul operands.
    w_bf16 = prepare_conv_weight(w_conv, use_bf16_matmul=True)
    out = jax.block_until_ready(
        self_attention_forward(x, w_bf16, gamma, beta, nheads=nheads))
    assert out.shape == (B, C, H, W)
    err = float(jnp.max(jnp.abs(out - ref)))
    assert err < 8e-2, f"bf16 path mismatch vs reference: max abs err = {err}"

    print("KERNEL_OK")
</pallas_src>

<mosaic_0001>
module attributes {stable_mosaic.version = 11 : i64} {
  func.func @_fused_self_attention_kernel(%arg0: i32, %arg1: memref<1x16x342xf32, #tpu.memory_space<vmem>>, %arg2: memref<48x144xf32, #tpu.memory_space<vmem>>, %arg3: memref<16x1xf32, #tpu.memory_space<vmem>>, %arg4: memref<16x1xf32, #tpu.memory_space<vmem>>, %arg5: memref<1x16x288xf32, #tpu.memory_space<vmem>>, %arg6: memref<144x288xf32, #tpu.memory_space<vmem>>, %arg7: memref<48x288xf32, #tpu.memory_space<vmem>>) attributes {dimension_semantics = [#tpu.dimension_semantics<parallel>], iteration_bounds = array<i64: 2>, scalar_prefetch = 0 : i64, scratch_operands = 2 : i64, tpu.core_type = #tpu.core_type<tc>, window_params = [{transform_indices = @transform_0, window_bounds = array<i64: 1, 16, 342>}, {pipeline_mode = #tpu.pipeline_mode<synchronous>, transform_indices = @transform_1, window_bounds = array<i64: 48, 144>}, {pipeline_mode = #tpu.pipeline_mode<synchronous>, transform_indices = @transform_2, window_bounds = array<i64: 16, 1>}, {pipeline_mode = #tpu.pipeline_mode<synchronous>, transform_indices = @transform_3, window_bounds = array<i64: 16, 1>}, {transform_indices = @transform_4, window_bounds = array<i64: 1, 16, 288>}]} {
    %0 = tpu.iota {dimensions = array<i32: 1>} : vector<1x288xi32>
    %c18_i32 = arith.constant 18 : i32
    %c0_i32 = arith.constant 0 : i32
    %1 = arith.cmpi eq, %c18_i32, %c0_i32 : i32
    %c1_i32 = arith.constant 1 : i32
    %2 = arith.select %1, %c1_i32, %c18_i32 : i32
    %3 = vector.broadcast %2 : i32 to vector<1x288xi32>
    %4 = arith.remsi %0, %3 : vector<1x288xi32>
    %c0_i32_0 = arith.constant 0 : i32
    %5 = vector.broadcast %c0_i32_0 : i32 to vector<1x288xi32>
    %6 = arith.cmpi ne, %4, %5 : vector<1x288xi32>
    %c0_i32_1 = arith.constant 0 : i32
    %7 = vector.broadcast %c0_i32_1 : i32 to vector<1x288xi32>
    %8 = arith.cmpi slt, %4, %7 : vector<1x288xi32>
    %c0_i32_2 = arith.constant 0 : i32
    %9 = arith.cmpi slt, %2, %c0_i32_2 : i32
    %10 = vector.broadcast %9 : i1 to vector<1x288xi1>
    %11 = vector.broadcast %10 : vector<1x288xi1> to vector<1x288xi1>
    %12 = arith.xori %8, %11 : vector<1x288xi1>
    %13 = arith.andi %12, %6 : vector<1x288xi1>
    %14 = vector.broadcast %2 : i32 to vector<1x288xi32>
    %15 = arith.addi %4, %14 : vector<1x288xi32>
    %16 = arith.select %13, %15, %4 : vector<1x288xi1>, vector<1x288xi32>
    %c16_i32 = arith.constant 16 : i32
    %17 = vector.broadcast %c16_i32 : i32 to vector<1x288xi32>
    %18 = arith.cmpi slt, %16, %17 : vector<1x288xi32>
    %19 = arith.extui %18 : vector<1x288xi1> to vector<1x288xi32>
    %20 = arith.sitofp %19 : vector<1x288xi32> to vector<1x288xf32>
    %c0 = arith.constant 0 : index
    %c0_3 = arith.constant 0 : index
    %c0_4 = arith.constant 0 : index
    %21 = vector.load %arg1[%c0, %c0_3, %c0_4] : memref<1x16x342xf32, #tpu.memory_space<vmem>>, vector<1x16x288xf32>
    %22 = vector.shape_cast %21 : vector<1x16x288xf32> to vector<16x288xf32>
    %c0_5 = arith.constant 0 : index
    %c0_6 = arith.constant 0 : index
    %23 = vector.load %arg6[%c0_5, %c0_6] : memref<144x288xf32, #tpu.memory_space<vmem>>, vector<16x288xf32>
    tpu.vector_store %arg6[%c0_5, %c0_6], %22 {strides = array<i32>} : memref<144x288xf32, #tpu.memory_space<vmem>>, vector<16x288xf32>,
    %c0_7 = arith.constant 0 : index
    %c0_8 = arith.constant 0 : index
    %c1 = arith.constant 1 : index
    %24 = vector.load %arg1[%c0_7, %c0_8, %c1] : memref<1x16x342xf32, #tpu.memory_space<vmem>>, vector<1x16x288xf32>
    %25 = vector.shape_cast %24 : vector<1x16x288xf32> to vector<16x288xf32>
    %c16 = arith.constant 16 : index
    %c0_9 = arith.constant 0 : index
    %26 = vector.load %arg6[%c16, %c0_9] : memref<144x288xf32, #tpu.memory_space<vmem>>, vector<16x288xf32>
    tpu.vector_store %arg6[%c16, %c0_9], %25 {strides = array<i32>} : memref<144x288xf32, #tpu.memory_space<vmem>>, vector<16x288xf32>,
    %c0_10 = arith.constant 0 : index
    %c0_11 = arith.constant 0 : index
    %c2 = arith.constant 2 : index
    %27 = vector.load %arg1[%c0_10, %c0_11, %c2] : memref<1x16x342xf32, #tpu.memory_space<vmem>>, vector<1x16x288xf32>
    %28 = vector.shape_cast %27 : vector<1x16x288xf32> to vector<16x288xf32>
    %c32 = arith.constant 32 : index
    %c0_12 = arith.constant 0 : index
    %29 = vector.load %arg6[%c32, %c0_12] : memref<144x288xf32, #tpu.memory_space<vmem>>, vector<16x288xf32>
    tpu.vector_store %arg6[%c32, %c0_12], %28 {strides = array<i32>} : memref<144x288xf32, #tpu.memory_space<vmem>>, vector<16x288xf32>,
    %c0_13 = arith.constant 0 : index
    %c0_14 = arith.constant 0 : index
    %c18 = arith.constant 18 : index
    %30 = vector.load %arg1[%c0_13, %c0_14, %c18] : memref<1x16x342xf32, #tpu.memory_space<vmem>>, vector<1x16x288xf32>
    %31 = vector.shape_cast %30 : vector<1x16x288xf32> to vector<16x288xf32>
    %c48 = arith.constant 48 : index
    %c0_15 = arith.constant 0 : index
    %32 = vector.load %arg6[%c48, %c0_15] : memref<144x288xf32, #tpu.memory_space<vmem>>, vector<16x288xf32>
    tpu.vector_store %arg6[%c48, %c0_15], %31 {strides = array<i32>} : memref<144x288xf32, #tpu.memory_space<vmem>>, vector<16x288xf32>,
    %c0_16 = arith.constant 0 : index
    %c0_17 = arith.constant 0 : index
    %c19 = arith.constant 19 : index
    %33 = vector.load %arg1[%c0_16, %c0_17, %c19] : memref<1x16x342xf32, #tpu.memory_space<vmem>>, vector<1x16x288xf32>
    %34 = vector.shape_cast %33 : vector<1x16x288xf32> to vector<16x288xf32>
    %c64 = arith.constant 64 : index
    %c0_18 = arith.constant 0 : index
    %35 = vector.load %arg6[%c64, %c0_18] : memref<144x288xf32, #tpu.memory_space<vmem>>, vector<16x288xf32>
    tpu.vector_store %arg6[%c64, %c0_18], %34 {strides = array<i32>} : memref<144x288xf32, #tpu.memory_space<vmem>>, vector<16x288xf32>,
    %c0_19 = arith.constant 0 : index
    %c0_20 = arith.constant 0 : index
    %c20 = arith.constant 20 : index
    %36 = vector.load %arg1[%c0_19, %c0_20, %c20] : memref<1x16x342xf32, #tpu.memory_space<vmem>>, vector<1x16x288xf32>
    %37 = vector.shape_cast %36 : vector<1x16x288xf32> to vector<16x288xf32>
    %c80 = arith.constant 80 : index
    %c0_21 = arith.constant 0 : index
    %38 = vector.load %arg6[%c80, %c0_21] : memref<144x288xf32, #tpu.memory_space<vmem>>, vector<16x288xf32>
    tpu.vector_store %arg6[%c80, %c0_21], %37 {strides = array<i32>} : memref<144x288xf32, #tpu.memory_space<vmem>>, vector<16x288xf32>,
    %c0_22 = arith.constant 0 : index
    %c0_23 = arith.constant 0 : index
    %c36 = arith.constant 36 : index
    %39 = vector.load %arg1[%c0_22, %c0_23, %c36] : memref<1x16x342xf32, #tpu.memory_space<vmem>>, vector<1x16x288xf32>
    %40 = vector.shape_cast %39 : vector<1x16x288xf32> to vector<16x288xf32>
    %c96 = arith.constant 96 : index
    %c0_24 = arith.constant 0 : index
    %41 = vector.load %arg6[%c96, %c0_24] : memref<144x288xf32, #tpu.memory_space<vmem>>, vector<16x288xf32>
    tpu.vector_store %arg6[%c96, %c0_24], %40 {strides = array<i32>} : memref<144x288xf32, #tpu.memory_space<vmem>>, vector<16x288xf32>,
    %c0_25 = arith.constant 0 : index
    %c0_26 = arith.constant 0 : index
    %c37 = arith.constant 37 : index
    %42 = vector.load %arg1[%c0_25, %c0_26, %c37] : memref<1x16x342xf32, #tpu.memory_space<vmem>>, vector<1x16x288xf32>
    %43 = vector.shape_cast %42 : vector<1x16x288xf32> to vector<16x288xf32>
    %c112 = arith.constant 112 : index
    %c0_27 = arith.constant 0 : index
    %44 = vector.load %arg6[%c112, %c0_27] : memref<144x288xf32, #tpu.memory_space<vmem>>, vector<16x288xf32>
    tpu.vector_store %arg6[%c112, %c0_27], %43 {strides = array<i32>} : memref<144x288xf32, #tpu.memory_space<vmem>>, vector<16x288xf32>,
    %c0_28 = arith.constant 0 : index
    %c0_29 = arith.constant 0 : index
    %c38 = arith.constant 38 : index
    %45 = vector.load %arg1[%c0_28, %c0_29, %c38] : memref<1x16x342xf32, #tpu.memory_space<vmem>>, vector<1x16x288xf32>
    %46 = vector.shape_cast %45 : vector<1x16x288xf32> to vector<16x288xf32>
    %c128 = arith.constant 128 : index
    %c0_30 = arith.constant 0 : index
    %47 = vector.load %arg6[%c128, %c0_30] : memref<144x288xf32, #tpu.memory_space<vmem>>, vector<16x288xf32>
    tpu.vector_store %arg6[%c128, %c0_30], %46 {strides = array<i32>} : memref<144x288xf32, #tpu.memory_space<vmem>>, vector<16x288xf32>,
    %c0_31 = arith.constant 0 : index
    %c0_32 = arith.constant 0 : index
    %48 = vector.load %arg2[%c0_31, %c0_32] : memref<48x144xf32, #tpu.memory_space<vmem>>, vector<48x144xf32>
    %c0_33 = arith.constant 0 : index
    %c0_34 = arith.constant 0 : index
    %49 = vector.load %arg6[%c0_33, %c0_34] : memref<144x288xf32, #tpu.memory_space<vmem>>, vector<144x288xf32>
    %cst = arith.constant dense<0.000000e+00> : vector<48x288xf32>
    %50 = tpu.matmul %48, %49, %cst {dimension_numbers = #tpu.dot_dimension_numbers<[1], [0], [0], [1], [0, 0, 1, 1], [], []>} : vector<48x144xf32>, vector<144x288xf32>, vector<48x288xf32> -> vector<48x288xf32>
    %51 = vector.broadcast %20 : vector<1x288xf32> to vector<48x288xf32>
    %52 = arith.mulf %50, %51 : vector<48x288xf32>
    %c0_35 = arith.constant 0 : index
    %c0_36 = arith.constant 0 : index
    %53 = vector.load %arg7[%c0_35, %c0_36] : memref<48x288xf32, #tpu.memory_space<vmem>>, vector<48x288xf32>
    tpu.vector_store %arg7[%c0_35, %c0_36], %52 {strides = array<i32>} : memref<48x288xf32, #tpu.memory_space<vmem>>, vector<48x288xf32>,
    %c0_37 = arith.constant 0 : index
    %c0_38 = arith.constant 0 : index
    %54 = vector.load %arg7[%c0_37, %c0_38] : memref<48x288xf32, #tpu.memory_space<vmem>>, vector<8x288xf32>
    %c16_39 = arith.constant 16 : index
    %c0_40 = arith.constant 0 : index
    %55 = vector.load %arg7[%c16_39, %c0_40] : memref<48x288xf32, #tpu.memory_space<vmem>>, vector<8x288xf32>
    %c32_41 = arith.constant 32 : index
    %c0_42 = arith.constant 0 : index
    %56 = vector.load %arg7[%c32_41, %c0_42] : memref<48x288xf32, #tpu.memory_space<vmem>>, vector<8x288xf32>
    %cst_43 = arith.constant dense<0.000000e+00> : vector<8x8xf32>
    %57 = tpu.matmul %54, %55, %cst_43 {dimension_numbers = #tpu.dot_dimension_numbers<[1], [1], [0], [0], [0, 0, 1, 0], [], []>} : vector<8x288xf32>, vector<8x288xf32>, vector<8x8xf32> -> vector<8x8xf32>
    %cst_44 = arith.constant 6.250000e-02 : f32
    %58 = vector.broadcast %cst_44 : f32 to vector<8x8xf32>
    %59 = arith.mulf %57, %58 : vector<8x8xf32>
    %cst_45 = arith.constant dense<0xFF800000> : vector<8xf32>
    %60 = vector.multi_reduction <maximumf>, %59, %cst_45 [1] : vector<8x8xf32> to vector<8xf32>
    %61 = vector.shape_cast %60 : vector<8xf32> to vector<8x1xf32>
    %62 = vector.broadcast %61 : vector<8x1xf32> to vector<8x8xf32>
    %63 = arith.subf %59, %62 : vector<8x8xf32>
    %64 = math.exp %63 : vector<8x8xf32>
    %cst_46 = arith.constant dense<0.000000e+00> : vector<8xf32>
    %65 = vector.multi_reduction <add>, %64, %cst_46 [1] : vector<8x8xf32> to vector<8xf32>
    %66 = vector.shape_cast %65 : vector<8xf32> to vector<8x1xf32>
    %67 = vector.broadcast %66 : vector<8x1xf32> to vector<8x8xf32>
    %68 = arith.divf %64, %67 : vector<8x8xf32>
    %cst_47 = arith.constant dense<0.000000e+00> : vector<8x288xf32>
    %69 = tpu.matmul %68, %56, %cst_47 {dimension_numbers = #tpu.dot_dimension_numbers<[1], [0], [0], [1], [0, 0, 1, 1], [], []>} : vector<8x8xf32>, vector<8x288xf32>, vector<8x288xf32> -> vector<8x288xf32>
    %c8 = arith.constant 8 : index
    %c0_48 = arith.constant 0 : index
    %70 = vector.load %arg7[%c8, %c0_48] : memref<48x288xf32, #tpu.memory_space<vmem>>, vector<8x288xf32>
    %c24 = arith.constant 24 : index
    %c0_49 = arith.constant 0 : index
    %71 = vector.load %arg7[%c24, %c0_49] : memref<48x288xf32, #tpu.memory_space<vmem>>, vector<8x288xf32>
    %c40 = arith.constant 40 : index
    %c0_50 = arith.constant 0 : index
    %72 = vector.load %arg7[%c40, %c0_50] : memref<48x288xf32, #tpu.memory_space<vmem>>, vector<8x288xf32>
    %cst_51 = arith.constant dense<0.000000e+00> : vector<8x8xf32>
    %73 = tpu.matmul %70, %71, %cst_51 {dimension_numbers = #tpu.dot_dimension_numbers<[1], [1], [0], [0], [0, 0, 1, 0], [], []>} : vector<8x288xf32>, vector<8x288xf32>, vector<8x8xf32> -> vector<8x8xf32>
    %cst_52 = arith.constant 6.250000e-02 : f32
    %74 = vector.broadcast %cst_52 : f32 to vector<8x8xf32>
    %75 = arith.mulf %73, %74 : vector<8x8xf32>
    %cst_53 = arith.constant dense<0xFF800000> : vector<8xf32>
    %76 = vector.multi_reduction <maximumf>, %75, %cst_53 [1] : vector<8x8xf32> to vector<8xf32>
    %77 = vector.shape_cast %76 : vector<8xf32> to vector<8x1xf32>
    %78 = vector.broadcast %77 : vector<8x1xf32> to vector<8x8xf32>
    %79 = arith.subf %75, %78 : vector<8x8xf32>
    %80 = math.exp %79 : vector<8x8xf32>
    %cst_54 = arith.constant dense<0.000000e+00> : vector<8xf32>
    %81 = vector.multi_reduction <add>, %80, %cst_54 [1] : vector<8x8xf32> to vector<8xf32>
    %82 = vector.shape_cast %81 : vector<8xf32> to vector<8x1xf32>
    %83 = vector.broadcast %82 : vector<8x1xf32> to vector<8x8xf32>
    %84 = arith.divf %80, %83 : vector<8x8xf32>
    %cst_55 = arith.constant dense<0.000000e+00> : vector<8x288xf32>
    %85 = tpu.matmul %84, %72, %cst_55 {dimension_numbers = #tpu.dot_dimension_numbers<[1], [0], [0], [1], [0, 0, 1, 1], [], []>} : vector<8x8xf32>, vector<8x288xf32>, vector<8x288xf32> -> vector<8x288xf32>
    %86 = tpu.concatenate %69, %85 in 0 : vector<8x288xf32>, vector<8x288xf32> -> vector<16x288xf32>
    %c0_56 = arith.constant 0 : index
    %c0_57 = arith.constant 0 : index
    %c19_58 = arith.constant 19 : index
    %87 = vector.load %arg1[%c0_56, %c0_57, %c19_58] : memref<1x16x342xf32, #tpu.memory_space<vmem>>, vector<1x16x288xf32>
    %88 = vector.shape_cast %87 : vector<1x16x288xf32> to vector<16x288xf32>
    %89 = arith.addf %88, %86 : vector<16x288xf32>
    %cst_59 = arith.constant dense<0.000000e+00> : vector<16xf32>
    %90 = vector.multi_reduction <add>, %89, %cst_59 [1] : vector<16x288xf32> to vector<16xf32>
    %91 = vector.shape_cast %90 : vector<16xf32> to vector<16x1xf32>
    %cst_60 = arith.constant 3.906250e-03 : f32
    %92 = vector.broadcast %cst_60 : f32 to vector<16x1xf32>
    %93 = arith.mulf %91, %92 : vector<16x1xf32>
    %94 = arith.mulf %89, %89 : vector<16x288xf32>
    %cst_61 = arith.constant dense<0.000000e+00> : vector<16xf32>
    %95 = vector.multi_reduction <add>, %94, %cst_61 [1] : vector<16x288xf32> to vector<16xf32>
    %96 = vector.shape_cast %95 : vector<16xf32> to vector<16x1xf32>
    %cst_62 = arith.constant 3.906250e-03 : f32
    %97 = vector.broadcast %cst_62 : f32 to vector<16x1xf32>
    %98 = arith.mulf %96, %97 : vector<16x1xf32>
    %99 = arith.mulf %93, %93 : vector<16x1xf32>
    %100 = arith.subf %98, %99 : vector<16x1xf32>
    %101 = vector.broadcast %93 : vector<16x1xf32> to vector<16x288xf32>
    %102 = arith.subf %89, %101 : vector<16x288xf32>
    %cst_63 = arith.constant 9.99999974E-6 : f32
    %103 = vector.broadcast %cst_63 : f32 to vector<16x1xf32>
    %104 = arith.addf %100, %103 : vector<16x1xf32>
    %105 = math.rsqrt %104 : vector<16x1xf32>
    %106 = vector.broadcast %105 : vector<16x1xf32> to vector<16x288xf32>
    %107 = arith.mulf %102, %106 : vector<16x288xf32>
    %c0_64 = arith.constant 0 : index
    %c0_65 = arith.constant 0 : index
    %108 = vector.load %arg3[%c0_64, %c0_65] : memref<16x1xf32, #tpu.memory_space<vmem>>, vector<16x1xf32>
    %109 = vector.broadcast %108 : vector<16x1xf32> to vector<16x288xf32>
    %110 = arith.mulf %107, %109 : vector<16x288xf32>
    %c0_66 = arith.constant 0 : index
    %c0_67 = arith.constant 0 : index
    %111 = vector.load %arg4[%c0_66, %c0_67] : memref<16x1xf32, #tpu.memory_space<vmem>>, vector<16x1xf32>
    %112 = vector.broadcast %111 : vector<16x1xf32> to vector<16x288xf32>
    %113 = arith.addf %110, %112 : vector<16x288xf32>
    %c0_68 = arith.constant 0 : index
    %c0_69 = arith.constant 0 : index
    %c0_70 = arith.constant 0 : index
    %114 = vector.load %arg5[%c0_68, %c0_69, %c0_70] : memref<1x16x288xf32, #tpu.memory_space<vmem>>, vector<1x16x288xf32>
    %115 = vector.shape_cast %114 : vector<1x16x288xf32> to vector<16x288xf32>
    %116 = vector.shape_cast %113 : vector<16x288xf32> to vector<1x16x288xf32>
    tpu.vector_store %arg5[%c0_68, %c0_69, %c0_70], %116 {strides = array<i32>} : memref<1x16x288xf32, #tpu.memory_space<vmem>>, vector<1x16x288xf32>,
    return
  }
  func.func @transform_0(%arg0: i32) -> (i32, i32, i32) {
    %c0_i32 = arith.constant 0 : i32
    %c0_i32_0 = arith.constant 0 : i32
    %c0_i32_1 = arith.constant 0 : i32
    return %arg0, %c0_i32, %c0_i32_0 : i32, i32, i32
  }
  func.func @transform_1(%arg0: i32) -> (i32, i32) {
    %c0_i32 = arith.constant 0 : i32
    %c0_i32_0 = arith.constant 0 : i32
    %c0_i32_1 = arith.constant 0 : i32
    return %c0_i32, %c0_i32_0 : i32, i32
  }
  func.func @transform_2(%arg0: i32) -> (i32, i32) {
    %c0_i32 = arith.constant 0 : i32
    %c0_i32_0 = arith.constant 0 : i32
    %c0_i32_1 = arith.constant 0 : i32
    return %c0_i32, %c0_i32_0 : i32, i32
  }
  func.func @transform_3(%arg0: i32) -> (i32, i32) {
    %c0_i32 = arith.constant 0 : i32
    %c0_i32_0 = arith.constant 0 : i32
    %c0_i32_1 = arith.constant 0 : i32
    return %c0_i32, %c0_i32_0 : i32, i32
  }
  func.func @transform_4(%arg0: i32) -> (i32, i32, i32) {
    %c0_i32 = arith.constant 0 : i32
    %c0_i32_0 = arith.constant 0 : i32
    %c0_i32_1 = arith.constant 0 : i32
    return %arg0, %c0_i32, %c0_i32_0 : i32, i32, i32
  }
}

</mosaic_0001>

<llo_original>
// kernel: self_attention_forward.1
$region0: #{self_attention_forward.1}
  #allocation0 [shape = 'u32[]', space=smem, size = 0x4, offset = 0x4, fixed_abs, tag = 'smem constant byte address 0x4 - core index']
  #allocation1 [shape = 'u32[72,128]{1,0:T(1,128)}', space=vmem, size = 0x9000, scoped, tag = 'internal scratch']
  #allocation2 [shape = 'f32[144,288]{1,0:T(8,128)}', space=vmem, size = 0x36000, scoped, tag = 'scratch operand']
  #allocation3 [shape = 'f32[48,288]{1,0:T(8,128)}', space=vmem, size = 0x12000, scoped, tag = 'scratch operand']
  %s0 = inlined_call_operand.vmem [shape: f32[2,16,342], index: 0, kind: input, shape index: {}]
  %s1 = inlined_call_operand.vmem [shape: f32[48,144], index: 1, kind: input, shape index: {}]
  %s2 = inlined_call_operand.vmem [shape: f32[16,1], index: 2, kind: input, shape index: {}]
  %s3 = inlined_call_operand.vmem [shape: f32[16,1], index: 3, kind: input, shape index: {}]
  %s4 = inlined_call_operand.vmem [shape: f32[2,16,288], index: 4, kind: output, shape index: {}]
  %s5 = sld [smem:[#allocation0]]
  $region49: #{self_attention_forward.1} parent=0
    _
  %s7 = ssub.s32 1, %s5
  %s8 = scalar_select 0, %s7, %s5
  loop: start=0, step=1, limit=4
  $region2: #{self_attention_forward.1} parent=0 // loop_pre_header
    _
  $region3: #{self_attention_forward.1} parent=0 // loop_header
    %s10 = sphi 0, %s14
    %p11 = scmp.ge.s32.totalorder %s10, 4
    %s20 = sphi 0, %s22
    %s23 = sphi 0, %s20
    %s24 = sphi 0, %s23
    %s40 = sphi 0, %s24
    %s44 = sphi 0, %s44
    %s46 = sphi 0, %s44
    %s47 = sphi 0, %s46
    %s61 = sphi 0, %s47
    %s65 = sphi 0, %s65
    %s67 = sphi 0, %s65
    %s68 = sphi 0, %s67
    %s82 = sphi 0, %s68
    %s86 = sphi 0, %s86
    %s88 = sphi 0, %s86
    %s89 = sphi 0, %s88
    %s103 = sphi 0, %s89
    %s109 = sphi 0, %s111
    %s112 = sphi 0, %s109
    %s113 = sphi 0, %s112
    %s129 = sphi 0, %s113
  $region4: #{self_attention_forward.1} parent=0 // loop_header_branch
    %13 = sbr.rel (%p11) target = $region8
  $region5: #{self_attention_forward.1} parent=0 // loop_body
    %s15 = ssub.s32 %s10, 1
    %s16 = ssub.s32 %s10, 2
    %s17 = sadd.s32 %s10, 1
    %s18 = ssub.s32 %s10, %s17
    %p19 = scmp.eq.s32.totalorder %s18, 0
    %s21 = sadd.s32 %s20, 1
    %s22 = scalar_select %p19, %s20, %s21
    %p25 = pneg %p19
    %p26 = scmp.eq.s32.totalorder %s10, 1
    %p27 = por %p25, %p26
    %p28 = scmp.ne.s32.totalorder %s20, %s23
    %p29 = scmp.eq.s32.totalorder %s10, 0
    %p30 = por %p28, %p29
    %p31 = scmp.ne.s32.totalorder %s20, %s23
    %p32 = scmp.eq.s32.totalorder %s15, 1
    %p33 = por %p31, %p32
    %p34 = scmp.ne.s32.totalorder %s23, %s24
    %p35 = scmp.eq.s32.totalorder %s15, 0
    %p36 = por %p34, %p35
    %p37 = scmp.ne.s32.totalorder %s23, %s24
    %p38 = scmp.eq.s32.totalorder %s16, 1
    %p39 = por %p37, %p38
    %p41 = scmp.ne.s32.totalorder %s24, %s40
    %p42 = scmp.eq.s32.totalorder %s16, 0
    %p43 = por %p41, %p42
    %s45 = sadd.s32 %s44, 1
    %p48 = scmp.eq.s32.totalorder %s10, 1
    %p49 = scmp.ne.s32.totalorder %s44, %s46
    %p50 = scmp.eq.s32.totalorder %s10, 0
    %p51 = por %p49, %p50
    %p52 = scmp.ne.s32.totalorder %s44, %s46
    %p53 = scmp.eq.s32.totalorder %s15, 1
    %p54 = por %p52, %p53
    %p55 = scmp.ne.s32.totalorder %s46, %s47
    %p56 = scmp.eq.s32.totalorder %s15, 0
    %p57 = por %p55, %p56
    %p58 = scmp.ne.s32.totalorder %s46, %s47
    %p59 = scmp.eq.s32.totalorder %s16, 1
    %p60 = por %p58, %p59
    %p62 = scmp.ne.s32.totalorder %s47, %s61
    %p63 = scmp.eq.s32.totalorder %s16, 0
    %p64 = por %p62, %p63
    %s66 = sadd.s32 %s65, 1
    %p69 = scmp.eq.s32.totalorder %s10, 1
    %p70 = scmp.ne.s32.totalorder %s65, %s67
    %p71 = scmp.eq.s32.totalorder %s10, 0
    %p72 = por %p70, %p71
    %p73 = scmp.ne.s32.totalorder %s65, %s67
    %p74 = scmp.eq.s32.totalorder %s15, 1
    %p75 = por %p73, %p74
    %p76 = scmp.ne.s32.totalorder %s67, %s68
    %p77 = scmp.eq.s32.totalorder %s15, 0
    %p78 = por %p76, %p77
    %p79 = scmp.ne.s32.totalorder %s67, %s68
    %p80 = scmp.eq.s32.totalorder %s16, 1
    %p81 = por %p79, %p80
    %p83 = scmp.ne.s32.totalorder %s68, %s82
    %p84 = scmp.eq.s32.totalorder %s16, 0
    %p85 = por %p83, %p84
    %s87 = sadd.s32 %s86, 1
    %p90 = scmp.eq.s32.totalorder %s10, 1
    %p91 = scmp.ne.s32.totalorder %s86, %s88
    %p92 = scmp.eq.s32.totalorder %s10, 0
    %p93 = por %p91, %p92
    %p94 = scmp.ne.s32.totalorder %s86, %s88
    %p95 = scmp.eq.s32.totalorder %s15, 1
    %p96 = por %p94, %p95
    %p97 = scmp.ne.s32.totalorder %s88, %s89
    %p98 = scmp.eq.s32.totalorder %s15, 0
    %p99 = por %p97, %p98
    %p100 = scmp.ne.s32.totalorder %s88, %s89
    %p101 = scmp.eq.s32.totalorder %s16, 1
    %p102 = por %p100, %p101
    %p104 = scmp.ne.s32.totalorder %s89, %s103
    %p105 = scmp.eq.s32.totalorder %s16, 0
    %p106 = por %p104, %p105
    %s107 = ssub.s32 %s10, %s17
    %p108 = scmp.eq.s32.totalorder %s107, 0
    %s110 = sadd.s32 %s109, 1
    %s111 = scalar_select %p108, %s109, %s110
    %p114 = pneg %p108
    %p115 = scmp.eq.s32.totalorder %s10, 1
    %p116 = por %p114, %p115
    %p117 = scmp.ne.s32.totalorder %s109, %s112
    %p118 = scmp.eq.s32.totalorder %s10, 0
    %p119 = por %p117, %p118
    %p120 = scmp.ne.s32.totalorder %s109, %s112
    %p121 = scmp.eq.s32.totalorder %s15, 1
    %p122 = por %p120, %p121
    %p123 = scmp.ne.s32.totalorder %s112, %s113
    %p124 = scmp.eq.s32.totalorder %s15, 0
    %p125 = por %p123, %p124
    %p126 = scmp.ne.s32.totalorder %s112, %s113
    %p127 = scmp.eq.s32.totalorder %s16, 1
    %p128 = por %p126, %p127
    %p130 = scmp.ne.s32.totalorder %s113, %s129
    %p131 = scmp.eq.s32.totalorder %s16, 0
    %p132 = por %p130, %p131
    %p133 = scmp.le.s32.totalorder 1, %s10
    %p134 = scmp.lt.s32.totalorder %s10, 3
    %p135 = pnand %p133, %p134
    %p136 = pneg %p135
    // Predicated region
    $region9: #{self_attention_forward.1} parent=5 // pred_check
      _
    $region10: #{self_attention_forward.1} parent=5 // pred_check_branch
      %138 = sbr.rel (%p135) target = $region12
    $region11: #{self_attention_forward.1} parent=5 // pred_region
      %s139 = ssub.s32 %s10, 1
      // Predicated region
      $region13: #{self_attention_forward.1} parent=11 // pred_check
        %p140 = pneg %p57
      $region14: #{self_attention_forward.1} parent=11 // pred_check_branch
        %142 = sbr.rel (%p140) target = $region16
      $region15: #{self_attention_forward.1} parent=11 // pred_region
        _
      $region16: #{self_attention_forward.1} parent=11 // pred_fallthru
        _
      // Predicated region
      $region17: #{self_attention_forward.1} parent=11 // pred_check
        %p143 = pneg %p78
      $region18: #{self_attention_forward.1} parent=11 // pred_check_branch
        %145 = sbr.rel (%p143) target = $region20
      $region19: #{self_attention_forward.1} parent=11 // pred_region
        _
      $region20: #{self_attention_forward.1} parent=11 // pred_fallthru
        _
      // Predicated region
      $region21: #{self_attention_forward.1} parent=11 // pred_check
        %p146 = pneg %p99
      $region22: #{self_attention_forward.1} parent=11 // pred_check_branch
        %148 = sbr.rel (%p146) target = $region24
      $region23: #{self_attention_forward.1} parent=11 // pred_region
        _
      $region24: #{self_attention_forward.1} parent=11 // pred_fallthru
        _
    $region12: #{self_attention_forward.1} parent=5 // pred_fallthru
      _
    %p149 = scmp.lt.s32.totalorder %s10, 2
    // Predicated region
    $region25: #{self_attention_forward.1} parent=5 // pred_check
      %p150 = pneg %p149
    $region26: #{self_attention_forward.1} parent=5 // pred_check_branch
      %152 = sbr.rel (%p150) target = $region28
    $region27: #{self_attention_forward.1} parent=5 // pred_region
      // Predicated region
      $region29: #{self_attention_forward.1} parent=27 // pred_check
        %p153 = pneg %p30
      $region30: #{self_attention_forward.1} parent=27 // pred_check_branch
        %155 = sbr.rel (%p153) target = $region32
      $region31: #{self_attention_forward.1} parent=27 // pred_region
        %p156 = scmp.lt.s32.totalorder %s10, 1
        %s157 = scalar_select %p156, %s10, 1
        %s158 = smul.addr %s157, 6
        %s159 = smul.addr %s158, 8
        %s160 = scalar_lea.vmem %s0, %s159
      $region32: #{self_attention_forward.1} parent=27 // pred_fallthru
        _
    $region28: #{self_attention_forward.1} parent=5 // pred_fallthru
      _
    %p161 = scmp.le.s32.totalorder 1, %s10
    %p162 = scmp.lt.s32.totalorder %s10, 3
    %p163 = pnand %p161, %p162
    %p164 = pneg %p163
    // Predicated region
    $region33: #{self_attention_forward.1} parent=5 // pred_check
      _
    $region34: #{self_attention_forward.1} parent=5 // pred_check_branch
      %166 = sbr.rel (%p163) target = $region36
    $region35: #{self_attention_forward.1} parent=5 // pred_region
      %s167 = ssub.s32 %s10, 1
      %p168 = scmp.lt.s32.totalorder %s15, 1
      %s169 = scalar_select %p168, %s15, 1
      %s170 = smul.addr %s169, 6
      %s171 = smul.addr %s170, 8
      %s172 = scalar_lea.vmem %s0, %s171
      %p173 = pneg %p36
      %p174 = pneg %p33
      %p175 = pneg %p57
      %p176 = pneg %p54
      %p177 = pneg %p78
      %p178 = pneg %p75
      %p179 = pneg %p99
      %p180 = pneg %p96
      %p181 = pneg %p125
      %p182 = pneg %p122
      %p183 = scmp.lt.s32.totalorder %s15, 1
      %s184 = scalar_select %p183, %s15, 1
      %s185 = smul.addr %s184, 6
      %s186 = smul.addr %s185, 8
      %s187 = scalar_lea.vmem %s4, %s186
      %p188 = scmp.lt.s32.totalorder %s15, 1
      %s189 = scalar_select %p188, %s15, 1
      %s190 = smul.addr %s189, 6
      %s191 = smul.addr %s190, 8
      %s192 = scalar_lea.vmem %s0, %s191
      %p193 = scmp.lt.s32.totalorder %s15, 1
      %s194 = scalar_select %p193, %s15, 1
      %s195 = smul.addr %s194, 6
      %s196 = smul.addr %s195, 8
      %s197 = scalar_lea.vmem %s4, %s196
      %v198 = vlaneseq
      %v199 = vand.u32 %v198, 127
      %v200 = vadd.s32 %v199, 128
      %v201 = vadd.s32 %v199, 256
      %vm202 = vcmp.lt.s32.totalorder %v199, 0
      %v203 = vsub.s32 0, %v199
      %v204 = vsel %vm202, %v203, %v199
      %v205 = vand.u32 %v204, 65535
      %v206 = vshrl.u32 %v204, 16
      %v208 = vmul.u32 %v205, 14564
      %v209 = vmul.u32 %v205, 58254
      %v210 = vmul.u32 %v206, 14564
      %v211 = vmul.u32 %v206, 58254
      %v212 = vshll.u32 %v209, 16
      %v213 = vshrl.u32 %v209, 16
      %v214 = vshll.u32 %v210, 16
      %v215 = vshrl.u32 %v210, 16
      %vm216 = vc.u32 %v208, %v212
      %v217 = vsel %vm216, 1, 0
      %v218 = vadd.s32 %v208, %v212
      %v219 = vadd.s32 %v211, %v217
      %vm220 = vc.u32 %v218, %v214
      %v221 = vsel %vm220, 1, 0
      %v222 = vadd.s32 %v218, %v214
      %v223 = vadd.s32 %v219, %v221
      %v224 = vadd.s32 %v223, %v213
      %v225 = vadd.s32 %v224, %v215
      %v226 = vshrl.u32 %v225, 4
      %v227 = vmul.u32 %v226, 18
      %v228 = vsub.s32 %v204, %v227
      %v229 = vsub.s32 0, %v228
      %v230 = vsel %vm202, %v229, %v228
      %vm231 = vcmp.lt.s32.totalorder %v200, 0
      %v232 = vsub.s32 0, %v200
      %v233 = vsel %vm231, %v232, %v200
      %v234 = vand.u32 %v233, 65535
      %v235 = vshrl.u32 %v233, 16
      %v237 = vmul.u32 %v234, 14564
      %v238 = vmul.u32 %v234, 58254
      %v239 = vmul.u32 %v235, 14564
      %v240 = vmul.u32 %v235, 58254
      %v241 = vshll.u32 %v238, 16
      %v242 = vshrl.u32 %v238, 16
      %v243 = vshll.u32 %v239, 16
      %v244 = vshrl.u32 %v239, 16
      %vm245 = vc.u32 %v237, %v241
      %v246 = vsel %vm245, 1, 0
      %v247 = vadd.s32 %v237, %v241
      %v248 = vadd.s32 %v240, %v246
      %vm249 = vc.u32 %v247, %v243
      %v250 = vsel %vm249, 1, 0
      %v251 = vadd.s32 %v247, %v243
      %v252 = vadd.s32 %v248, %v250
      %v253 = vadd.s32 %v252, %v242
      %v254 = vadd.s32 %v253, %v244
      %v255 = vshrl.u32 %v254, 4
      %v256 = vmul.u32 %v255, 18
      %v257 = vsub.s32 %v233, %v256
      %v258 = vsub.s32 0, %v257
      %v259 = vsel %vm231, %v258, %v257
      %vm260 = vcmp.lt.s32.totalorder %v201, 0
      %v261 = vsub.s32 0, %v201
      %v262 = vsel %vm260, %v261, %v201
      %v263 = vand.u32 %v262, 65535
      %v264 = vshrl.u32 %v262, 16
      %v266 = vmul.u32 %v263, 14564
      %v267 = vmul.u32 %v263, 58254
      %v268 = vmul.u32 %v264, 14564
      %v269 = vmul.u32 %v264, 58254
      %v270 = vshll.u32 %v267, 16
      %v271 = vshrl.u32 %v267, 16
      %v272 = vshll.u32 %v268, 16
      %v273 = vshrl.u32 %v268, 16
      %vm274 = vc.u32 %v266, %v270
      %v275 = vsel %vm274, 1, 0
      %v276 = vadd.s32 %v266, %v270
      %v277 = vadd.s32 %v269, %v275
      %vm278 = vc.u32 %v276, %v272
      %v279 = vsel %vm278, 1, 0
      %v280 = vadd.s32 %v276, %v272
      %v281 = vadd.s32 %v277, %v279
      %v282 = vadd.s32 %v281, %v271
      %v283 = vadd.s32 %v282, %v273
      %v284 = vshrl.u32 %v283, 4
      %v285 = vmul.u32 %v284, 18
      %v286 = vsub.s32 %v262, %v285
      %v287 = vsub.s32 0, %v286
      %v288 = vsel %vm260, %v287, %v286
      %vm289 = vcmp.ne.s32.totalorder %v230, 0
      %vm290 = vcmp.ne.s32.totalorder %v259, 0
      %vm291 = vcmp.ne.s32.totalorder %v288, 0
      %vm292 = vcmp.lt.s32.totalorder %v230, 0
      %vm293 = vcmp.lt.s32.totalorder %v259, 0
      %vm294 = vcmp.lt.s32.totalorder %v288, 0
      %vm295 = vmand %vm292, %vm289
      %vm296 = vmand %vm293, %vm290
      %vm297 = vmand %vm294, %vm291
      %v298 = vadd.s32 %v230, 18
      %v299 = vadd.s32 %v259, 18
      %v300 = vadd.s32 %v288, 18
      %v301 = vsel %vm295, %v298, %v230
      %v302 = vsel %vm296, %v299, %v259
      %v303 = vsel %vm297, %v300, %v288
      %vm304 = vcmp.lt.s32.totalorder %v301, 16
      %vm305 = vcmp.lt.s32.totalorder %v302, 16
      %vm306 = vcmp.lt.s32.totalorder %v303, 16
      %v307 = vsel %vm304, 1, 0
      %v308 = vsel %vm305, 1, 0
      %v309 = vsel %vm306, 1, 0
      %v310 = vcvt.s32.f32 %v307
      %v311 = vcvt.s32.f32 %v308
      %v312 = vcvt.s32.f32 %v309
      %v313 = vld [vmem:[%s192] sm:$0xff]
      %v314 = vld [vmem:[%s192 + $0x8] sm:$0xff]
      %v315 = vld [vmem:[%s192 + $0x10] sm:$0xff]
      %v316 = vld [vmem:[%s192 + $0x18] sm:$0xff]
      %v317 = vld [vmem:[%s192 + $0x20] sm:$0xff]
      %v318 = vld [vmem:[%s192 + $0x28] sm:$0xff]
      %319 = vst [vmem:[#allocation2] sm:$0xff] %v313
      %320 = vst [vmem:[#allocation2 + $0x8] sm:$0xff] %v314
      %vm321 = vcmask 261120
      %322 = vst.msk [vmem:[#allocation2 + $0x10] sm:$0xff] %vm321, %v315
      %323 = vst [vmem:[#allocation2 + $0x18] sm:$0xff] %v316
      %324 = vst [vmem:[#allocation2 + $0x20] sm:$0xff] %v317
      %325 = vst.msk [vmem:[#allocation2 + $0x28] sm:$0xff] %vm321, %v318
      %v326 = vld [vmem:[%s192] sm:$0xff]
      %v327 = vld [vmem:[%s192 + $0x8] sm:$0xff]
      %v328 = vld [vmem:[%s192 + $0x10] sm:$0xff]
      %v329 = vld [vmem:[%s192 + $0x18] sm:$0xff]
      %v330 = vld [vmem:[%s192 + $0x20] sm:$0xff]
      %v331 = vld [vmem:[%s192 + $0x28] sm:$0xff]
      %338 = vrot.lane.b32.xlu0 %v326, 127
      %v339 = vpop.permute.xlu0 %338
      %340 = vrot.lane.b32.xlu0 %v327, 127
      %v341 = vpop.permute.xlu0 %340
      %342 = vrot.lane.b32.xlu0 %v328, 127
      %v343 = vpop.permute.xlu0 %342
      %344 = vrot.lane.b32.xlu0 %v329, 127
      %v345 = vpop.permute.xlu0 %344
      %346 = vrot.lane.b32.xlu0 %v330, 127
      %v347 = vpop.permute.xlu0 %346
      %348 = vrot.lane.b32.xlu0 %v331, 127
      %v349 = vpop.permute.xlu0 %348
      %vm350 = vcmask 1039360
      %v351 = vsel %vm350, %v339, %v341
      %v352 = vsel %vm350, %v341, %v343
      %v353 = vsel %vm350, %v345, %v347
      %v354 = vsel %vm350, %v347, %v349
      %361 = vst [vmem:[#allocation2 + $0x30] sm:$0xff] %v351
      %362 = vst [vmem:[#allocation2 + $0x38] sm:$0xff] %v352
      %363 = vst.msk [vmem:[#allocation2 + $0x40] sm:$0xff] %vm321, %v343
      %364 = vst [vmem:[#allocation2 + $0x48] sm:$0xff] %v353
      %365 = vst [vmem:[#allocation2 + $0x50] sm:$0xff] %v354
      %366 = vst.msk [vmem:[#allocation2 + $0x58] sm:$0xff] %vm321, %v349
      %v367 = vld [vmem:[%s192] sm:$0xff]
      %v368 = vld [vmem:[%s192 + $0x8] sm:$0xff]
      %v369 = vld [vmem:[%s192 + $0x10] sm:$0xff]
      %v370 = vld [vmem:[%s192 + $0x18] sm:$0xff]
      %v371 = vld [vmem:[%s192 + $0x20] sm:$0xff]
      %v372 = vld [vmem:[%s192 + $0x28] sm:$0xff]
      %379 = vrot.lane.b32.xlu0 %v367, 126
      %v380 = vpop.permute.xlu0 %379
      %381 = vrot.lane.b32.xlu0 %v368, 126
      %v382 = vpop.permute.xlu0 %381
      %383 = vrot.lane.b32.xlu0 %v369, 126
      %v384 = vpop.permute.xlu0 %383
      %385 = vrot.lane.b32.xlu0 %v370, 126
      %v386 = vpop.permute.xlu0 %385
      %387 = vrot.lane.b32.xlu0 %v371, 126
      %v388 = vpop.permute.xlu0 %387
      %389 = vrot.lane.b32.xlu0 %v372, 126
      %v390 = vpop.permute.xlu0 %389
      %vm391 = vcmask 1031168
      %v392 = vsel %vm391, %v380, %v382
      %v393 = vsel %vm391, %v382, %v384
      %v394 = vsel %vm391, %v386, %v388
      %v395 = vsel %vm391, %v388, %v390
      %402 = vst [vmem:[#allocation2 + $0x60] sm:$0xff] %v392
      %403 = vst [vmem:[#allocation2 + $0x68] sm:$0xff] %v393
      %404 = vst.msk [vmem:[#allocation2 + $0x70] sm:$0xff] %vm321, %v384
      %405 = vst [vmem:[#allocation2 + $0x78] sm:$0xff] %v394
      %406 = vst [vmem:[#allocation2 + $0x80] sm:$0xff] %v395
      %407 = vst.msk [vmem:[#allocation2 + $0x88] sm:$0xff] %vm321, %v390
      %v408 = vld [vmem:[%s192] sm:$0xff]
      %v409 = vld [vmem:[%s192 + $0x8] sm:$0xff]
      %v410 = vld [vmem:[%s192 + $0x10] sm:$0xff]
      %v411 = vld [vmem:[%s192 + $0x18] sm:$0xff]
      %v412 = vld [vmem:[%s192 + $0x20] sm:$0xff]
      %v413 = vld [vmem:[%s192 + $0x28] sm:$0xff]
      %420 = vrot.lane.b32.xlu0 %v408, 110
      %v421 = vpop.permute.xlu0 %420
      %422 = vrot.lane.b32.xlu0 %v409, 110
      %v423 = vpop.permute.xlu0 %422
      %424 = vrot.lane.b32.xlu0 %v410, 110
      %v425 = vpop.permute.xlu0 %424
      %426 = vrot.lane.b32.xlu0 %v411, 110
      %v427 = vpop.permute.xlu0 %426
      %428 = vrot.lane.b32.xlu0 %v412, 110
      %v429 = vpop.permute.xlu0 %428
      %430 = vrot.lane.b32.xlu0 %v413, 110
      %v431 = vpop.permute.xlu0 %430
      %vm432 = vcmask 900096
      %v433 = vsel %vm432, %v421, %v423
      %v434 = vsel %vm432, %v423, %v425
      %v435 = vsel %vm432, %v427, %v429
      %v436 = vsel %vm432, %v429, %v431
      %443 = vst [vmem:[#allocation2 + $0x90] sm:$0xff] %v433
      %444 = vst [vmem:[#allocation2 + $0x98] sm:$0xff] %v434
      %445 = vst.msk [vmem:[#allocation2 + $0xa0] sm:$0xff] %vm321, %v425
      %446 = vst [vmem:[#allocation2 + $0xa8] sm:$0xff] %v435
      %447 = vst [vmem:[#allocation2 + $0xb0] sm:$0xff] %v436
      %448 = vst.msk [vmem:[#allocation2 + $0xb8] sm:$0xff] %vm321, %v431
      %v449 = vld [vmem:[%s192] sm:$0xff]
      %v450 = vld [vmem:[%s192 + $0x8] sm:$0xff]
      %v451 = vld [vmem:[%s192 + $0x10] sm:$0xff]
      %v452 = vld [vmem:[%s192 + $0x18] sm:$0xff]
      %v453 = vld [vmem:[%s192 + $0x20] sm:$0xff]
      %v454 = vld [vmem:[%s192 + $0x28] sm:$0xff]
      %461 = vrot.lane.b32.xlu0 %v449, 109
      %v462 = vpop.permute.xlu0 %461
      %463 = vrot.lane.b32.xlu0 %v450, 109
      %v464 = vpop.permute.xlu0 %463
      %465 = vrot.lane.b32.xlu0 %v451, 109
      %v466 = vpop.permute.xlu0 %465
      %467 = vrot.lane.b32.xlu0 %v452, 109
      %v468 = vpop.permute.xlu0 %467
      %469 = vrot.lane.b32.xlu0 %v453, 109
      %v470 = vpop.permute.xlu0 %469
      %471 = vrot.lane.b32.xlu0 %v454, 109
      %v472 = vpop.permute.xlu0 %471
      %vm473 = vcmask 891904
      %v474 = vsel %vm473, %v462, %v464
      %v475 = vsel %vm473, %v464, %v466
      %v476 = vsel %vm473, %v468, %v470
      %v477 = vsel %vm473, %v470, %v472
      %484 = vst [vmem:[#allocation2 + $0xc0] sm:$0xff] %v474
      %485 = vst [vmem:[#allocation2 + $0xc8] sm:$0xff] %v475
      %486 = vst.msk [vmem:[#allocation2 + $0xd0] sm:$0xff] %vm321, %v466
      %487 = vst [vmem:[#allocation2 + $0xd8] sm:$0xff] %v476
      %488 = vst [vmem:[#allocation2 + $0xe0] sm:$0xff] %v477
      %489 = vst.msk [vmem:[#allocation2 + $0xe8] sm:$0xff] %vm321, %v472
      %v490 = vld [vmem:[%s192] sm:$0xff]
      %v491 = vld [vmem:[%s192 + $0x8] sm:$0xff]
      %v492 = vld [vmem:[%s192 + $0x10] sm:$0xff]
      %v493 = vld [vmem:[%s192 + $0x18] sm:$0xff]
      %v494 = vld [vmem:[%s192 + $0x20] sm:$0xff]
      %v495 = vld [vmem:[%s192 + $0x28] sm:$0xff]
      %502 = vrot.lane.b32.xlu0 %v490, 108
      %v503 = vpop.permute.xlu0 %502
      %504 = vrot.lane.b32.xlu0 %v491, 108
      %v505 = vpop.permute.xlu0 %504
      %506 = vrot.lane.b32.xlu0 %v492, 108
      %v507 = vpop.permute.xlu0 %506
      %508 = vrot.lane.b32.xlu0 %v493, 108
      %v509 = vpop.permute.xlu0 %508
      %510 = vrot.lane.b32.xlu0 %v494, 108
      %v511 = vpop.permute.xlu0 %510
      %512 = vrot.lane.b32.xlu0 %v495, 108
      %v513 = vpop.permute.xlu0 %512
      %vm514 = vcmask 883712
      %v515 = vsel %vm514, %v503, %v505
      %v516 = vsel %vm514, %v505, %v507
      %v517 = vsel %vm514, %v509, %v511
      %v518 = vsel %vm514, %v511, %v513
      %525 = vst [vmem:[#allocation2 + $0xf0] sm:$0xff] %v515
      %526 = vst [vmem:[#allocation2 + $0xf8] sm:$0xff] %v516
      %527 = vst.msk [vmem:[#allocation2 + $0x100] sm:$0xff] %vm321, %v507
      %528 = vst [vmem:[#allocation2 + $0x108] sm:$0xff] %v517
      %529 = vst [vmem:[#allocation2 + $0x110] sm:$0xff] %v518
      %530 = vst.msk [vmem:[#allocation2 + $0x118] sm:$0xff] %vm321, %v513
      %v531 = vld [vmem:[%s192] sm:$0xff]
      %v532 = vld [vmem:[%s192 + $0x8] sm:$0xff]
      %v533 = vld [vmem:[%s192 + $0x10] sm:$0xff]
      %v534 = vld [vmem:[%s192 + $0x18] sm:$0xff]
      %v535 = vld [vmem:[%s192 + $0x20] sm:$0xff]
      %v536 = vld [vmem:[%s192 + $0x28] sm:$0xff]
      %543 = vrot.lane.b32.xlu0 %v531, 92
      %v544 = vpop.permute.xlu0 %543
      %545 = vrot.lane.b32.xlu0 %v532, 92
      %v546 = vpop.permute.xlu0 %545
      %547 = vrot.lane.b32.xlu0 %v533, 92
      %v548 = vpop.permute.xlu0 %547
      %549 = vrot.lane.b32.xlu0 %v534, 92
      %v550 = vpop.permute.xlu0 %549
      %551 = vrot.lane.b32.xlu0 %v535, 92
      %v552 = vpop.permute.xlu0 %551
      %553 = vrot.lane.b32.xlu0 %v536, 92
      %v554 = vpop.permute.xlu0 %553
      %vm555 = vcmask 752640
      %v556 = vsel %vm555, %v544, %v546
      %v557 = vsel %vm555, %v546, %v548
      %v558 = vsel %vm555, %v550, %v552
      %v559 = vsel %vm555, %v552, %v554
      %566 = vst [vmem:[#allocation2 + $0x120] sm:$0xff] %v556
      %567 = vst [vmem:[#allocation2 + $0x128] sm:$0xff] %v557
      %568 = vst.msk [vmem:[#allocation2 + $0x130] sm:$0xff] %vm321, %v548
      %569 = vst [vmem:[#allocation2 + $0x138] sm:$0xff] %v558
      %570 = vst [vmem:[#allocation2 + $0x140] sm:$0xff] %v559
      %571 = vst.msk [vmem:[#allocation2 + $0x148] sm:$0xff] %vm321, %v554
      %v572 = vld [vmem:[%s192] sm:$0xff]
      %v573 = vld [vmem:[%s192 + $0x8] sm:$0xff]
      %v574 = vld [vmem:[%s192 + $0x10] sm:$0xff]
      %v575 = vld [vmem:[%s192 + $0x18] sm:$0xff]
      %v576 = vld [vmem:[%s192 + $0x20] sm:$0xff]
      %v577 = vld [vmem:[%s192 + $0x28] sm:$0xff]
      %584 = vrot.lane.b32.xlu0 %v572, 91
      %v585 = vpop.permute.xlu0 %584
      %586 = vrot.lane.b32.xlu0 %v573, 91
      %v587 = vpop.permute.xlu0 %586
      %588 = vrot.lane.b32.xlu0 %v574, 91
      %v589 = vpop.permute.xlu0 %588
      %590 = vrot.lane.b32.xlu0 %v575, 91
      %v591 = vpop.permute.xlu0 %590
      %592 = vrot.lane.b32.xlu0 %v576, 91
      %v593 = vpop.permute.xlu0 %592
      %594 = vrot.lane.b32.xlu0 %v577, 91
      %v595 = vpop.permute.xlu0 %594
      %vm596 = vcmask 744448
      %v597 = vsel %vm596, %v585, %v587
      %v598 = vsel %vm596, %v587, %v589
      %v599 = vsel %vm596, %v591, %v593
      %v600 = vsel %vm596, %v593, %v595
      %607 = vst [vmem:[#allocation2 + $0x150] sm:$0xff] %v597
      %608 = vst [vmem:[#allocation2 + $0x158] sm:$0xff] %v598
      %609 = vst.msk [vmem:[#allocation2 + $0x160] sm:$0xff] %vm321, %v589
      %610 = vst [vmem:[#allocation2 + $0x168] sm:$0xff] %v599
      %611 = vst [vmem:[#allocation2 + $0x170] sm:$0xff] %v600
      %612 = vst.msk [vmem:[#allocation2 + $0x178] sm:$0xff] %vm321, %v595
      %v613 = vld [vmem:[%s192] sm:$0xff]
      %v614 = vld [vmem:[%s192 + $0x8] sm:$0xff]
      %v615 = vld [vmem:[%s192 + $0x10] sm:$0xff]
      %v616 = vld [vmem:[%s192 + $0x18] sm:$0xff]
      %v617 = vld [vmem:[%s192 + $0x20] sm:$0xff]
      %v618 = vld [vmem:[%s192 + $0x28] sm:$0xff]
      %625 = vrot.lane.b32.xlu0 %v613, 90
      %v626 = vpop.permute.xlu0 %625
      %627 = vrot.lane.b32.xlu0 %v614, 90
      %v628 = vpop.permute.xlu0 %627
      %629 = vrot.lane.b32.xlu0 %v615, 90
      %v630 = vpop.permute.xlu0 %629
      %631 = vrot.lane.b32.xlu0 %v616, 90
      %v632 = vpop.permute.xlu0 %631
      %633 = vrot.lane.b32.xlu0 %v617, 90
      %v634 = vpop.permute.xlu0 %633
      %635 = vrot.lane.b32.xlu0 %v618, 90
      %v636 = vpop.permute.xlu0 %635
      %vm637 = vcmask 736256
      %v638 = vsel %vm637, %v626, %v628
      %v639 = vsel %vm637, %v628, %v630
      %v640 = vsel %vm637, %v632, %v634
      %v641 = vsel %vm637, %v634, %v636
      %648 = vst [vmem:[#allocation2 + $0x180] sm:$0xff] %v638
      %649 = vst [vmem:[#allocation2 + $0x188] sm:$0xff] %v639
      %650 = vst.msk [vmem:[#allocation2 + $0x190] sm:$0xff] %vm321, %v630
      %651 = vst [vmem:[#allocation2 + $0x198] sm:$0xff] %v640
      %652 = vst [vmem:[#allocation2 + $0x1a0] sm:$0xff] %v641
      %653 = vst.msk [vmem:[#allocation2 + $0x1a8] sm:$0xff] %vm321, %v636
      %v654 = vld [vmem:[%s1] sm:$0xff]
      %v655 = vld [vmem:[%s1 + $0x8] sm:$0xff]
      %v656 = vld [vmem:[%s1 + $0x10] sm:$0xff]
      %v657 = vld [vmem:[%s1 + $0x18] sm:$0xff]
      %v658 = vld [vmem:[%s1 + $0x20] sm:$0xff]
      %v659 = vld [vmem:[%s1 + $0x28] sm:$0xff]
      %v660 = vld [vmem:[%s1 + $0x30] sm:$0xff]
      %v661 = vld [vmem:[%s1 + $0x38] sm:$0xff]
      %v662 = vld [vmem:[%s1 + $0x40] sm:$0xff]
      %v663 = vld [vmem:[%s1 + $0x48] sm:$0xff]
      %v664 = vld [vmem:[%s1 + $0x50] sm:$0xff]
      %v665 = vld [vmem:[%s1 + $0x58] sm:$0xff]
      %v666 = vld [vmem:[#allocation2] sm:$0xff]
      %v667 = vld [vmem:[#allocation2 + $0x8] sm:$0xff]
      %v668 = vld [vmem:[#allocation2 + $0x10] sm:$0xff]
      %v669 = vld [vmem:[#allocation2 + $0x18] sm:$0xff]
      %v670 = vld [vmem:[#allocation2 + $0x20] sm:$0xff]
      %v671 = vld [vmem:[#allocation2 + $0x28] sm:$0xff]
      %v672 = vld [vmem:[#allocation2 + $0x30] sm:$0xff]
      %v673 = vld [vmem:[#allocation2 + $0x38] sm:$0xff]
      %v674 = vld [vmem:[#allocation2 + $0x40] sm:$0xff]
      %v675 = vld [vmem:[#allocation2 + $0x48] sm:$0xff]
      %v676 = vld [vmem:[#allocation2 + $0x50] sm:$0xff]
      %v677 = vld [vmem:[#allocation2 + $0x58] sm:$0xff]
      %v678 = vld [vmem:[#allocation2 + $0x60] sm:$0xff]
      %v679 = vld [vmem:[#allocation2 + $0x68] sm:$0xff]
      %v680 = vld [vmem:[#allocation2 + $0x70] sm:$0xff]
      %v681 = vld [vmem:[#allocation2 + $0x78] sm:$0xff]
      %v682 = vld [vmem:[#allocation2 + $0x80] sm:$0xff]
      %v683 = vld [vmem:[#allocation2 + $0x88] sm:$0xff]
      %v684 = vld [vmem:[#allocation2 + $0x90] sm:$0xff]
      %v685 = vld [vmem:[#allocation2 + $0x98] sm:$0xff]
      %v686 = vld [vmem:[#allocation2 + $0xa0] sm:$0xff]
      %v687 = vld [vmem:[#allocation2 + $0xa8] sm:$0xff]
      %v688 = vld [vmem:[#allocation2 + $0xb0] sm:$0xff]
      %v689 = vld [vmem:[#allocation2 + $0xb8] sm:$0xff]
      %v690 = vld [vmem:[#allocation2 + $0xc0] sm:$0xff]
      %v691 = vld [vmem:[#allocation2 + $0xc8] sm:$0xff]
      %v692 = vld [vmem:[#allocation2 + $0xd0] sm:$0xff]
      %v693 = vld [vmem:[#allocation2 + $0xd8] sm:$0xff]
      %v694 = vld [vmem:[#allocation2 + $0xe0] sm:$0xff]
      %v695 = vld [vmem:[#allocation2 + $0xe8] sm:$0xff]
      %v696 = vld [vmem:[#allocation2 + $0xf0] sm:$0xff]
      %v697 = vld [vmem:[#allocation2 + $0xf8] sm:$0xff]
      %v698 = vld [vmem:[#allocation2 + $0x100] sm:$0xff]
      %v699 = vld [vmem:[#allocation2 + $0x108] sm:$0xff]
      %v700 = vld [vmem:[#allocation2 + $0x110] sm:$0xff]
      %v701 = vld [vmem:[#allocation2 + $0x118] sm:$0xff]
      %v702 = vld [vmem:[#allocation2 + $0x120] sm:$0xff]
      %v703 = vld [vmem:[#allocation2 + $0x128] sm:$0xff]
      %v704 = vld [vmem:[#allocation2 + $0x130] sm:$0xff]
      %v705 = vld [vmem:[#allocation2 + $0x138] sm:$0xff]
      %v706 = vld [vmem:[#allocation2 + $0x140] sm:$0xff]
      %v707 = vld [vmem:[#allocation2 + $0x148] sm:$0xff]
      %v708 = vld [vmem:[#allocation2 + $0x150] sm:$0xff]
      %v709 = vld [vmem:[#allocation2 + $0x158] sm:$0xff]
      %v710 = vld [vmem:[#allocation2 + $0x160] sm:$0xff]
      %v711 = vld [vmem:[#allocation2 + $0x168] sm:$0xff]
      %v712 = vld [vmem:[#allocation2 + $0x170] sm:$0xff]
      %v713 = vld [vmem:[#allocation2 + $0x178] sm:$0xff]
      %v714 = vld [vmem:[#allocation2 + $0x180] sm:$0xff]
      %v715 = vld [vmem:[#allocation2 + $0x188] sm:$0xff]
      %v716 = vld [vmem:[#allocation2 + $0x190] sm:$0xff]
      %v717 = vld [vmem:[#allocation2 + $0x198] sm:$0xff]
      %v718 = vld [vmem:[#allocation2 + $0x1a0] sm:$0xff]
      %v719 = vld [vmem:[#allocation2 + $0x1a8] sm:$0xff]
      %vm720 = vcmask 130048
      %v722 = vsel %vm720, %v655, 0
      %v725 = vsel %vm720, %v657, 0
      %v728 = vsel %vm720, %v659, 0
      %v731 = vsel %vm720, %v661, 0
      %v734 = vsel %vm720, %v663, 0
      %v737 = vsel %vm720, %v665, 0
      %739 = vmatpush.msra.mxu0 %v711
      %740 = vmatpush.msra.mxu0 %v708
      %741 = vmatpush.msra.mxu0 %v705
      %742 = vmatpush.msra.mxu0 %v702
      %743 = vmatpush.msra.mxu0 %v699
      %744 = vmatpush.msra.mxu0 %v696
      %745 = vmatpush.msra.mxu0 %v693
      %746 = vmatpush.msra.mxu0 %v690
      %747 = vmatpush.msra.mxu0 %v687
      %748 = vmatpush.msra.mxu0 %v684
      %749 = vmatpush.msra.mxu0 %v681
      %750 = vmatpush.msra.mxu0 %v678
      %751 = vmatpush.msra.mxu0 %v675
      %752 = vmatpush.msra.mxu0 %v672
      %753 = vmatpush.msra.mxu0 %v669
      %754 = vmatpush.msra.mxu0 %v666
      %755 = vmatmul.f32.gmra.mxu0 %v654
      %v756 = vpop.f32.mrf.mxu0
      %v757 = vadd.f32 0.0, %v756
      %758 = vmatmul.f32.gmra.mxu0 %v656
      %v759 = vpop.f32.mrf.mxu0
      %v760 = vadd.f32 0.0, %v759
      %761 = vmatmul.f32.gmra.mxu0 %v658
      %v762 = vpop.f32.mrf.mxu0
      %v763 = vadd.f32 0.0, %v762
      %764 = vmatmul.f32.gmra.mxu0 %v660
      %v765 = vpop.f32.mrf.mxu0
      %v766 = vadd.f32 0.0, %v765
      %767 = vmatmul.f32.gmra.mxu0 %v662
      %v768 = vpop.f32.mrf.mxu0
      %v769 = vadd.f32 0.0, %v768
      %770 = vmatmul.f32.gmra.mxu0 %v664
      %v771 = vpop.f32.mrf.mxu0
      %v772 = vadd.f32 0.0, %v771
      %773 = vdwg.mxu0
      %774 = vmatpush.msra.mxu0 0.0
      %775 = vmatpush.msra.mxu0 0.0
      %776 = vmatpush.msra.mxu0 0.0
      %777 = vmatpush.msra.mxu0 0.0
      %778 = vmatpush.msra.mxu0 0.0
      %779 = vmatpush.msra.mxu0 0.0
      %780 = vmatpush.msra.mxu0 0.0
      %781 = vmatpush.msra.mxu0 0.0
      %782 = vmatpush.msra.mxu0 0.0
      %783 = vmatpush.msra.mxu0 0.0
      %784 = vmatpush.msra.mxu0 0.0
      %785 = vmatpush.msra.mxu0 0.0
      %786 = vmatpush.msra.mxu0 0.0
      %787 = vmatpush.msra.mxu0 0.0
      %788 = vmatpush.msra.mxu0 %v717
      %789 = vmatpush.msra.mxu0 %v714
      %790 = vmatmul.f32.gmra.mxu0 %v722
      %v791 = vpop.f32.mrf.mxu0
      %v792 = vadd.f32 %v757, %v791
      %793 = vmatmul.f32.gmra.mxu0 %v725
      %v794 = vpop.f32.mrf.mxu0
      %v795 = vadd.f32 %v760, %v794
      %796 = vmatmul.f32.gmra.mxu0 %v728
      %v797 = vpop.f32.mrf.mxu0
      %v798 = vadd.f32 %v763, %v797
      %799 = vmatmul.f32.gmra.mxu0 %v731
      %v800 = vpop.f32.mrf.mxu0
      %v801 = vadd.f32 %v766, %v800
      %802 = vmatmul.f32.gmra.mxu0 %v734
      %v803 = vpop.f32.mrf.mxu0
      %v804 = vadd.f32 %v769, %v803
      %805 = vmatmul.f32.gmra.mxu0 %v737
      %v806 = vpop.f32.mrf.mxu0
      %v807 = vadd.f32 %v772, %v806
      %808 = vdwg.mxu0
      %809 = vmatpush.msra.mxu0 %v712
      %810 = vmatpush.msra.mxu0 %v709
      %811 = vmatpush.msra.mxu0 %v706
      %812 = vmatpush.msra.mxu0 %v703
      %813 = vmatpush.msra.mxu0 %v700
      %814 = vmatpush.msra.mxu0 %v697
      %815 = vmatpush.msra.mxu0 %v694
      %816 = vmatpush.msra.mxu0 %v691
      %817 = vmatpush.msra.mxu0 %v688
      %818 = vmatpush.msra.mxu0 %v685
      %819 = vmatpush.msra.mxu0 %v682
      %820 = vmatpush.msra.mxu0 %v679
      %821 = vmatpush.msra.mxu0 %v676
      %822 = vmatpush.msra.mxu0 %v673
      %823 = vmatpush.msra.mxu0 %v670
      %824 = vmatpush.msra.mxu0 %v667
      %825 = vmatmul.f32.gmra.mxu0 %v654
      %v826 = vpop.f32.mrf.mxu0
      %v827 = vadd.f32 0.0, %v826
      %828 = vmatmul.f32.gmra.mxu0 %v656
      %v829 = vpop.f32.mrf.mxu0
      %v830 = vadd.f32 0.0, %v829
      %831 = vmatmul.f32.gmra.mxu0 %v658
      %v832 = vpop.f32.mrf.mxu0
      %v833 = vadd.f32 0.0, %v832
      %834 = vmatmul.f32.gmra.mxu0 %v660
      %v835 = vpop.f32.mrf.mxu0
      %v836 = vadd.f32 0.0, %v835
      %837 = vmatmul.f32.gmra.mxu0 %v662
      %v838 = vpop.f32.mrf.mxu0
      %v839 = vadd.f32 0.0, %v838
      %840 = vmatmul.f32.gmra.mxu0 %v664
      %v841 = vpop.f32.mrf.mxu0
      %v842 = vadd.f32 0.0, %v841
      %843 = vdwg.mxu0
      %844 = vmatpush.msra.mxu0 0.0
      %845 = vmatpush.msra.mxu0 0.0
      %846 = vmatpush.msra.mxu0 0.0
      %847 = vmatpush.msra.mxu0 0.0
      %848 = vmatpush.msra.mxu0 0.0
      %849 = vmatpush.msra.mxu0 0.0
      %850 = vmatpush.msra.mxu0 0.0
      %851 = vmatpush.msra.mxu0 0.0
      %852 = vmatpush.msra.mxu0 0.0
      %853 = vmatpush.msra.mxu0 0.0
      %854 = vmatpush.msra.mxu0 0.0
      %855 = vmatpush.msra.mxu0 0.0
      %856 = vmatpush.msra.mxu0 0.0
      %857 = vmatpush.msra.mxu0 0.0
      %858 = vmatpush.msra.mxu0 %v718
      %859 = vmatpush.msra.mxu0 %v715
      %860 = vmatmul.f32.gmra.mxu0 %v722
      %v861 = vpop.f32.mrf.mxu0
      %v862 = vadd.f32 %v827, %v861
      %863 = vmatmul.f32.gmra.mxu0 %v725
      %v864 = vpop.f32.mrf.mxu0
      %v865 = vadd.f32 %v830, %v864
      %866 = vmatmul.f32.gmra.mxu0 %v728
      %v867 = vpop.f32.mrf.mxu0
      %v868 = vadd.f32 %v833, %v867
      %869 = vmatmul.f32.gmra.mxu0 %v731
      %v870 = vpop.f32.mrf.mxu0
      %v871 = vadd.f32 %v836, %v870
      %872 = vmatmul.f32.gmra.mxu0 %v734
      %v873 = vpop.f32.mrf.mxu0
      %v874 = vadd.f32 %v839, %v873
      %875 = vmatmul.f32.gmra.mxu0 %v737
      %v876 = vpop.f32.mrf.mxu0
      %v877 = vadd.f32 %v842, %v876
      %878 = vdwg.mxu0
      %879 = vmatpush.msra.mxu0 %v713
      %880 = vmatpush.msra.mxu0 %v710
      %881 = vmatpush.msra.mxu0 %v707
      %882 = vmatpush.msra.mxu0 %v704
      %883 = vmatpush.msra.mxu0 %v701
      %884 = vmatpush.msra.mxu0 %v698
      %885 = vmatpush.msra.mxu0 %v695
      %886 = vmatpush.msra.mxu0 %v692
      %887 = vmatpush.msra.mxu0 %v689
      %888 = vmatpush.msra.mxu0 %v686
      %889 = vmatpush.msra.mxu0 %v683
      %890 = vmatpush.msra.mxu0 %v680
      %891 = vmatpush.msra.mxu0 %v677
      %892 = vmatpush.msra.mxu0 %v674
      %893 = vmatpush.msra.mxu0 %v671
      %894 = vmatpush.msra.mxu0 %v668
      %895 = vmatmul.f32.gmra.mxu0 %v654
      %v896 = vpop.f32.mrf.mxu0
      %v897 = vadd.f32 0.0, %v896
      %898 = vmatmul.f32.gmra.mxu0 %v656
      %v899 = vpop.f32.mrf.mxu0
      %v900 = vadd.f32 0.0, %v899
      %901 = vmatmul.f32.gmra.mxu0 %v658
      %v902 = vpop.f32.mrf.mxu0
      %v903 = vadd.f32 0.0, %v902
      %904 = vmatmul.f32.gmra.mxu0 %v660
      %v905 = vpop.f32.mrf.mxu0
      %v906 = vadd.f32 0.0, %v905
      %907 = vmatmul.f32.gmra.mxu0 %v662
      %v908 = vpop.f32.mrf.mxu0
      %v909 = vadd.f32 0.0, %v908
      %910 = vmatmul.f32.gmra.mxu0 %v664
      %v911 = vpop.f32.mrf.mxu0
      %v912 = vadd.f32 0.0, %v911
      %913 = vdwg.mxu0
      %914 = vmatpush.msra.mxu0 0.0
      %915 = vmatpush.msra.mxu0 0.0
      %916 = vmatpush.msra.mxu0 0.0
      %917 = vmatpush.msra.mxu0 0.0
      %918 = vmatpush.msra.mxu0 0.0
      %919 = vmatpush.msra.mxu0 0.0
      %920 = vmatpush.msra.mxu0 0.0
      %921 = vmatpush.msra.mxu0 0.0
      %922 = vmatpush.msra.mxu0 0.0
      %923 = vmatpush.msra.mxu0 0.0
      %924 = vmatpush.msra.mxu0 0.0
      %925 = vmatpush.msra.mxu0 0.0
      %926 = vmatpush.msra.mxu0 0.0
      %927 = vmatpush.msra.mxu0 0.0
      %928 = vmatpush.msra.mxu0 %v719
      %929 = vmatpush.msra.mxu0 %v716
      %930 = vmatmul.f32.gmra.mxu0 %v722
      %v931 = vpop.f32.mrf.mxu0
      %v932 = vadd.f32 %v897, %v931
      %933 = vmatmul.f32.gmra.mxu0 %v725
      %v934 = vpop.f32.mrf.mxu0
      %v935 = vadd.f32 %v900, %v934
      %936 = vmatmul.f32.gmra.mxu0 %v728
      %v937 = vpop.f32.mrf.mxu0
      %v938 = vadd.f32 %v903, %v937
      %939 = vmatmul.f32.gmra.mxu0 %v731
      %v940 = vpop.f32.mrf.mxu0
      %v941 = vadd.f32 %v906, %v940
      %942 = vmatmul.f32.gmra.mxu0 %v734
      %v943 = vpop.f32.mrf.mxu0
      %v944 = vadd.f32 %v909, %v943
      %945 = vmatmul.f32.gmra.mxu0 %v737
      %v946 = vpop.f32.mrf.mxu0
      %v947 = vadd.f32 %v912, %v946
      %948 = vdwg.mxu0
      %v949 = vmul.f32 %v792, %v310
      %v950 = vmul.f32 %v862, %v311
      %v951 = vmul.f32 %v932, %v312
      %v952 = vmul.f32 %v795, %v310
      %v953 = vmul.f32 %v865, %v311
      %v954 = vmul.f32 %v935, %v312
      %v955 = vmul.f32 %v798, %v310
      %v956 = vmul.f32 %v868, %v311
      %v957 = vmul.f32 %v938, %v312
      %v958 = vmul.f32 %v801, %v310
      %v959 = vmul.f32 %v871, %v311
      %v960 = vmul.f32 %v941, %v312
      %v961 = vmul.f32 %v804, %v310
      %v962 = vmul.f32 %v874, %v311
      %v963 = vmul.f32 %v944, %v312
      %v964 = vmul.f32 %v807, %v310
      %v965 = vmul.f32 %v877, %v311
      %v966 = vmul.f32 %v947, %v312
      %967 = vst [vmem:[#allocation3] sm:$0xff] %v949
      %968 = vst [vmem:[#allocation3 + $0x8] sm:$0xff] %v950
      %969 = vst.msk [vmem:[#allocation3 + $0x10] sm:$0xff] %vm321, %v951
      %970 = vst [vmem:[#allocation3 + $0x18] sm:$0xff] %v952
      %971 = vst [vmem:[#allocation3 + $0x20] sm:$0xff] %v953
      %972 = vst.msk [vmem:[#allocation3 + $0x28] sm:$0xff] %vm321, %v954
      %973 = vst [vmem:[#allocation3 + $0x30] sm:$0xff] %v955
      %974 = vst [vmem:[#allocation3 + $0x38] sm:$0xff] %v956
      %975 = vst.msk [vmem:[#allocation3 + $0x40] sm:$0xff] %vm321, %v957
      %976 = vst [vmem:[#allocation3 + $0x48] sm:$0xff] %v958
      %977 = vst [vmem:[#allocation3 + $0x50] sm:$0xff] %v959
      %978 = vst.msk [vmem:[#allocation3 + $0x58] sm:$0xff] %vm321, %v960
      %979 = vst [vmem:[#allocation3 + $0x60] sm:$0xff] %v961
      %980 = vst [vmem:[#allocation3 + $0x68] sm:$0xff] %v962
      %981 = vst.msk [vmem:[#allocation3 + $0x70] sm:$0xff] %vm321, %v963
      %982 = vst [vmem:[#allocation3 + $0x78] sm:$0xff] %v964
      %983 = vst [vmem:[#allocation3 + $0x80] sm:$0xff] %v965
      %984 = vst.msk [vmem:[#allocation3 + $0x88] sm:$0xff] %vm321, %v966
      %v985 = vld [vmem:[#allocation3] sm:$0xff]
      %v986 = vld [vmem:[#allocation3 + $0x8] sm:$0xff]
      %v987 = vld [vmem:[#allocation3 + $0x10] sm:$0xff]
      %v988 = vld [vmem:[#allocation3 + $0x30] sm:$0xff]
      %v989 = vld [vmem:[#allocation3 + $0x38] sm:$0xff]
      %v990 = vld [vmem:[#allocation3 + $0x40] sm:$0xff]
      %v991 = vld [vmem:[#allocation3 + $0x60] sm:$0xff]
      %v992 = vld [vmem:[#allocation3 + $0x68] sm:$0xff]
      %v993 = vld [vmem:[#allocation3 + $0x70] sm:$0xff]
      %v995 = vsel %vm321, %v987, 0
      %v998 = vsel %vm321, %v990, 0
      %1000 = vmatpush.xpose.msra.mxu0 0.0
      %1001 = vmatpush.xpose.msra.mxu0 0.0
      %1002 = vmatpush.xpose.msra.mxu0 0.0
      %1003 = vmatpush.xpose.msra.mxu0 0.0
      %1004 = vmatpush.xpose.msra.mxu0 0.0
      %1005 = vmatpush.xpose.msra.mxu0 0.0
      %1006 = vmatpush.xpose.msra.mxu0 0.0
      %1007 = vmatpush.xpose.msra.mxu0 0.0
      %1008 = vmatpush.xpose.msra.mxu0 0.0
      %1009 = vmatpush.xpose.msra.mxu0 0.0
      %1010 = vmatpush.xpose.msra.mxu0 0.0
      %1011 = vmatpush.xpose.msra.mxu0 0.0
      %1012 = vmatpush.xpose.msra.mxu0 0.0
      %1013 = vmatpush.xpose.msra.mxu0 0.0
      %1014 = vmatpush.xpose.msra.mxu0 0.0
      %1015 = vmatpush.xpose.msra.mxu0 %v988
      %1016 = vmatmul.f32.gmra.mxu0 %v985
      %v1017 = vpop.f32.mrf.mxu0
      %v1018 = vadd.f32 0.0, %v1017
      %1019 = vdwg.mxu0
      %1020 = vmatpush.xpose.msra.mxu0 0.0
      %1021 = vmatpush.xpose.msra.mxu0 0.0
      %1022 = vmatpush.xpose.msra.mxu0 0.0
      %1023 = vmatpush.xpose.msra.mxu0 0.0
      %1024 = vmatpush.xpose.msra.mxu0 0.0
      %1025 = vmatpush.xpose.msra.mxu0 0.0
      %1026 = vmatpush.xpose.msra.mxu0 0.0
      %1027 = vmatpush.xpose.msra.mxu0 0.0
      %1028 = vmatpush.xpose.msra.mxu0 0.0
      %1029 = vmatpush.xpose.msra.mxu0 0.0
      %1030 = vmatpush.xpose.msra.mxu0 0.0
      %1031 = vmatpush.xpose.msra.mxu0 0.0
      %1032 = vmatpush.xpose.msra.mxu0 0.0
      %1033 = vmatpush.xpose.msra.mxu0 0.0
      %1034 = vmatpush.xpose.msra.mxu0 0.0
      %1035 = vmatpush.xpose.msra.mxu0 %v989
      %1036 = vmatmul.f32.gmra.mxu0 %v986
      %v1037 = vpop.f32.mrf.mxu0
      %v1038 = vadd.f32 %v1018, %v1037
      %1039 = vdwg.mxu0
      %1040 = vmatpush.xpose.msra.mxu0 0.0
      %1041 = vmatpush.xpose.msra.mxu0 0.0
      %1042 = vmatpush.xpose.msra.mxu0 0.0
      %1043 = vmatpush.xpose.msra.mxu0 0.0
      %1044 = vmatpush.xpose.msra.mxu0 0.0
      %1045 = vmatpush.xpose.msra.mxu0 0.0
      %1046 = vmatpush.xpose.msra.mxu0 0.0
      %1047 = vmatpush.xpose.msra.mxu0 0.0
      %1048 = vmatpush.xpose.msra.mxu0 0.0
      %1049 = vmatpush.xpose.msra.mxu0 0.0
      %1050 = vmatpush.xpose.msra.mxu0 0.0
      %1051 = vmatpush.xpose.msra.mxu0 0.0
      %1052 = vmatpush.xpose.msra.mxu0 0.0
      %1053 = vmatpush.xpose.msra.mxu0 0.0
      %1054 = vmatpush.xpose.msra.mxu0 0.0
      %1055 = vmatpush.xpose.msra.mxu0 %v998
      %1056 = vmatmul.f32.gmra.mxu0 %v995
      %v1057 = vpop.f32.mrf.mxu0
      %v1058 = vadd.f32 %v1038, %v1057
      %1059 = vdwg.mxu0
      %v1060 = vmul.f32 %v1058, 0.0625
      %vm1061 = vcmask 64512
      %v1062 = vsel %vm1061, %v1060, -inf
      %1063 = vmax.xlane.f32.xlu0 %v1062
      %v1064 = vpop.xlane.xlu0 %1063
      %v1065 = vsub.f32 %v1060, %v1064
      %v1066 = vmul.f32 %v1065, 1.442695
      %v1067 = vpow.pop %v1066
      %v1068 = vsel %vm1061, %v1067, 0.0
      %1069 = vadd.xlane.f32.xlu0 %v1068
      %v1070 = vpop.xlane.xlu0 %1069
      %v1071 = vrcp.pop %v1070
      %v1072 = vmul.f32 %v1070, %v1071
      %v1073 = vsub.f32 1.0, %v1072
      %v1074 = vmul.f32 %v1071, %v1073
      %v1075 = vadd.f32 %v1071, %v1074
      %vm1076 = vweird.f32 %v1070
      %vm1077 = vweird.f32 %v1071
      %vm1078 = vmor %vm1076, %vm1077
      %v1079 = vsel %vm1078, %v1071, %v1075
      %v1080 = vand.u32 2147483647, %v1070
      %vm1081 = vcmp.eq.f32.partialorder %v1080, 8.507059e+37
      %v1082 = vand.u32 %v1070, 2147483648
      %v1083 = vor.u32 1.1754944e-38, %v1082
      %v1084 = vsel %vm1081, %v1083, %v1079
      %v1085 = vmul.f32 %v1067, %v1084
      %v1087 = vsel %vm1061, %v1085, 0
      %1089 = vmatpush.msra.mxu0 0.0
      %1090 = vmatpush.msra.mxu0 0.0
      %1091 = vmatpush.msra.mxu0 0.0
      %1092 = vmatpush.msra.mxu0 0.0
      %1093 = vmatpush.msra.mxu0 0.0
      %1094 = vmatpush.msra.mxu0 0.0
      %1095 = vmatpush.msra.mxu0 0.0
      %1096 = vmatpush.msra.mxu0 0.0
      %1097 = vmatpush.msra.mxu0 0.0
      %1098 = vmatpush.msra.mxu0 0.0
      %1099 = vmatpush.msra.mxu0 0.0
      %1100 = vmatpush.msra.mxu0 0.0
      %1101 = vmatpush.msra.mxu0 0.0
      %1102 = vmatpush.msra.mxu0 0.0
      %1103 = vmatpush.msra.mxu0 0.0
      %1104 = vmatpush.msra.mxu0 %v991
      %1105 = vmatmul.f32.gmra.mxu0 %v1087
      %v1106 = vpop.f32.mrf.mxu0
      %v1107 = vadd.f32 0.0, %v1106
      %1108 = vdwg.mxu0
      %1109 = vmatpush.msra.mxu0 0.0
      %1110 = vmatpush.msra.mxu0 0.0
      %1111 = vmatpush.msra.mxu0 0.0
      %1112 = vmatpush.msra.mxu0 0.0
      %1113 = vmatpush.msra.mxu0 0.0
      %1114 = vmatpush.msra.mxu0 0.0
      %1115 = vmatpush.msra.mxu0 0.0
      %1116 = vmatpush.msra.mxu0 0.0
      %1117 = vmatpush.msra.mxu0 0.0
      %1118 = vmatpush.msra.mxu0 0.0
      %1119 = vmatpush.msra.mxu0 0.0
      %1120 = vmatpush.msra.mxu0 0.0
      %1121 = vmatpush.msra.mxu0 0.0
      %1122 = vmatpush.msra.mxu0 0.0
      %1123 = vmatpush.msra.mxu0 0.0
      %1124 = vmatpush.msra.mxu0 %v992
      %1125 = vmatmul.f32.gmra.mxu0 %v1087
      %v1126 = vpop.f32.mrf.mxu0
      %v1127 = vadd.f32 0.0, %v1126
      %1128 = vdwg.mxu0
      %1129 = vmatpush.msra.mxu0 0.0
      %1130 = vmatpush.msra.mxu0 0.0
      %1131 = vmatpush.msra.mxu0 0.0
      %1132 = vmatpush.msra.mxu0 0.0
      %1133 = vmatpush.msra.mxu0 0.0
      %1134 = vmatpush.msra.mxu0 0.0
      %1135 = vmatpush.msra.mxu0 0.0
      %1136 = vmatpush.msra.mxu0 0.0
      %1137 = vmatpush.msra.mxu0 0.0
      %1138 = vmatpush.msra.mxu0 0.0
      %1139 = vmatpush.msra.mxu0 0.0
      %1140 = vmatpush.msra.mxu0 0.0
      %1141 = vmatpush.msra.mxu0 0.0
      %1142 = vmatpush.msra.mxu0 0.0
      %1143 = vmatpush.msra.mxu0 0.0
      %1144 = vmatpush.msra.mxu0 %v993
      %1145 = vmatmul.f32.gmra.mxu0 %v1087
      %v1146 = vpop.f32.mrf.mxu0
      %v1147 = vadd.f32 0.0, %v1146
      %1148 = vdwg.mxu0
      %v1149 = vld [vmem:[#allocation3 + $0x18] sm:$0xff]
      %v1150 = vld [vmem:[#allocation3 + $0x20] sm:$0xff]
      %v1151 = vld [vmem:[#allocation3 + $0x28] sm:$0xff]
      %v1152 = vld [vmem:[#allocation3 + $0x48] sm:$0xff]
      %v1153 = vld [vmem:[#allocation3 + $0x50] sm:$0xff]
      %v1154 = vld [vmem:[#allocation3 + $0x58] sm:$0xff]
      %v1155 = vld [vmem:[#allocation3 + $0x78] sm:$0xff]
      %v1156 = vld [vmem:[#allocation3 + $0x80] sm:$0xff]
      %v1157 = vld [vmem:[#allocation3 + $0x88] sm:$0xff]
      %v1159 = vsel %vm321, %v1151, 0
      %v1162 = vsel %vm321, %v1154, 0
      %1164 = vmatpush.xpose.msra.mxu0 0.0
      %1165 = vmatpush.xpose.msra.mxu0 0.0
      %1166 = vmatpush.xpose.msra.mxu0 0.0
      %1167 = vmatpush.xpose.msra.mxu0 0.0
      %1168 = vmatpush.xpose.msra.mxu0 0.0
      %1169 = vmatpush.xpose.msra.mxu0 0.0
      %1170 = vmatpush.xpose.msra.mxu0 0.0
      %1171 = vmatpush.xpose.msra.mxu0 0.0
      %1172 = vmatpush.xpose.msra.mxu0 0.0
      %1173 = vmatpush.xpose.msra.mxu0 0.0
      %1174 = vmatpush.xpose.msra.mxu0 0.0
      %1175 = vmatpush.xpose.msra.mxu0 0.0
      %1176 = vmatpush.xpose.msra.mxu0 0.0
      %1177 = vmatpush.xpose.msra.mxu0 0.0
      %1178 = vmatpush.xpose.msra.mxu0 0.0
      %1179 = vmatpush.xpose.msra.mxu0 %v1152
      %1180 = vmatmul.f32.gmra.mxu0 %v1149
      %v1181 = vpop.f32.mrf.mxu0
      %v1182 = vadd.f32 0.0, %v1181
      %1183 = vdwg.mxu0
      %1184 = vmatpush.xpose.msra.mxu0 0.0
      %1185 = vmatpush.xpose.msra.mxu0 0.0
      %1186 = vmatpush.xpose.msra.mxu0 0.0
      %1187 = vmatpush.xpose.msra.mxu0 0.0
      %1188 = vmatpush.xpose.msra.mxu0 0.0
      %1189 = vmatpush.xpose.msra.mxu0 0.0
      %1190 = vmatpush.xpose.msra.mxu0 0.0
      %1191 = vmatpush.xpose.msra.mxu0 0.0
      %1192 = vmatpush.xpose.msra.mxu0 0.0
      %1193 = vmatpush.xpose.msra.mxu0 0.0
      %1194 = vmatpush.xpose.msra.mxu0 0.0
      %1195 = vmatpush.xpose.msra.mxu0 0.0
      %1196 = vmatpush.xpose.msra.mxu0 0.0
      %1197 = vmatpush.xpose.msra.mxu0 0.0
      %1198 = vmatpush.xpose.msra.mxu0 0.0
      %1199 = vmatpush.xpose.msra.mxu0 %v1153
      %1200 = vmatmul.f32.gmra.mxu0 %v1150
      %v1201 = vpop.f32.mrf.mxu0
      %v1202 = vadd.f32 %v1182, %v1201
      %1203 = vdwg.mxu0
      %1204 = vmatpush.xpose.msra.mxu0 0.0
      %1205 = vmatpush.xpose.msra.mxu0 0.0
      %1206 = vmatpush.xpose.msra.mxu0 0.0
      %1207 = vmatpush.xpose.msra.mxu0 0.0
      %1208 = vmatpush.xpose.msra.mxu0 0.0
      %1209 = vmatpush.xpose.msra.mxu0 0.0
      %1210 = vmatpush.xpose.msra.mxu0 0.0
      %1211 = vmatpush.xpose.msra.mxu0 0.0
      %1212 = vmatpush.xpose.msra.mxu0 0.0
      %1213 = vmatpush.xpose.msra.mxu0 0.0
      %1214 = vmatpush.xpose.msra.mxu0 0.0
      %1215 = vmatpush.xpose.msra.mxu0 0.0
      %1216 = vmatpush.xpose.msra.mxu0 0.0
      %1217 = vmatpush.xpose.msra.mxu0 0.0
      %1218 = vmatpush.xpose.msra.mxu0 0.0
      %1219 = vmatpush.xpose.msra.mxu0 %v1162
      %1220 = vmatmul.f32.gmra.mxu0 %v1159
      %v1221 = vpop.f32.mrf.mxu0
      %v1222 = vadd.f32 %v1202, %v1221
      %1223 = vdwg.mxu0
      %v1224 = vmul.f32 %v1222, 0.0625
      %v1225 = vsel %vm1061, %v1224, -inf
      %1226 = vmax.xlane.f32.xlu0 %v1225
      %v1227 = vpop.xlane.xlu0 %1226
      %v1228 = vsub.f32 %v1224, %v1227
      %v1229 = vmul.f32 %v1228, 1.442695
      %v1230 = vpow.pop %v1229
      %v1231 = vsel %vm1061, %v1230, 0.0
      %1232 = vadd.xlane.f32.xlu0 %v1231
      %v1233 = vpop.xlane.xlu0 %1232
      %v1234 = vrcp.pop %v1233
      %v1235 = vmul.f32 %v1233, %v1234
      %v1236 = vsub.f32 1.0, %v1235
      %v1237 = vmul.f32 %v1234, %v1236
      %v1238 = vadd.f32 %v1234, %v1237
      %vm1239 = vweird.f32 %v1233
      %vm1240 = vweird.f32 %v1234
      %vm1241 = vmor %vm1239, %vm1240
      %v1242 = vsel %vm1241, %v1234, %v1238
      %v1243 = vand.u32 2147483647, %v1233
      %vm1244 = vcmp.eq.f32.partialorder %v1243, 8.507059e+37
      %v1245 = vand.u32 %v1233, 2147483648
      %v1246 = vor.u32 1.1754944e-38, %v1245
      %v1247 = vsel %vm1244, %v1246, %v1242
      %v1248 = vmul.f32 %v1230, %v1247
      %v1250 = vsel %vm1061, %v1248, 0
      %1252 = vmatpush.msra.mxu0 0.0
      %1253 = vmatpush.msra.mxu0 0.0
      %1254 = vmatpush.msra.mxu0 0.0
      %1255 = vmatpush.msra.mxu0 0.0
      %1256 = vmatpush.msra.mxu0 0.0
      %1257 = vmatpush.msra.mxu0 0.0
      %1258 = vmatpush.msra.mxu0 0.0
      %1259 = vmatpush.msra.mxu0 0.0
      %1260 = vmatpush.msra.mxu0 0.0
      %1261 = vmatpush.msra.mxu0 0.0
      %1262 = vmatpush.msra.mxu0 0.0
      %1263 = vmatpush.msra.mxu0 0.0
      %1264 = vmatpush.msra.mxu0 0.0
      %1265 = vmatpush.msra.mxu0 0.0
      %1266 = vmatpush.msra.mxu0 0.0
      %1267 = vmatpush.msra.mxu0 %v1155
      %1268 = vmatmul.f32.gmra.mxu0 %v1250
      %v1269 = vpop.f32.mrf.mxu0
      %v1270 = vadd.f32 0.0, %v1269
      %1271 = vdwg.mxu0
      %1272 = vmatpush.msra.mxu0 0.0
      %1273 = vmatpush.msra.mxu0 0.0
      %1274 = vmatpush.msra.mxu0 0.0
      %1275 = vmatpush.msra.mxu0 0.0
      %1276 = vmatpush.msra.mxu0 0.0
      %1277 = vmatpush.msra.mxu0 0.0
      %1278 = vmatpush.msra.mxu0 0.0
      %1279 = vmatpush.msra.mxu0 0.0
      %1280 = vmatpush.msra.mxu0 0.0
      %1281 = vmatpush.msra.mxu0 0.0
      %1282 = vmatpush.msra.mxu0 0.0
      %1283 = vmatpush.msra.mxu0 0.0
      %1284 = vmatpush.msra.mxu0 0.0
      %1285 = vmatpush.msra.mxu0 0.0
      %1286 = vmatpush.msra.mxu0 0.0
      %1287 = vmatpush.msra.mxu0 %v1156
      %1288 = vmatmul.f32.gmra.mxu0 %v1250
      %v1289 = vpop.f32.mrf.mxu0
      %v1290 = vadd.f32 0.0, %v1289
      %1291 = vdwg.mxu0
      %1292 = vmatpush.msra.mxu0 0.0
      %1293 = vmatpush.msra.mxu0 0.0
      %1294 = vmatpush.msra.mxu0 0.0
      %1295 = vmatpush.msra.mxu0 0.0
      %1296 = vmatpush.msra.mxu0 0.0
      %1297 = vmatpush.msra.mxu0 0.0
      %1298 = vmatpush.msra.mxu0 0.0
      %1299 = vmatpush.msra.mxu0 0.0
      %1300 = vmatpush.msra.mxu0 0.0
      %1301 = vmatpush.msra.mxu0 0.0
      %1302 = vmatpush.msra.mxu0 0.0
      %1303 = vmatpush.msra.mxu0 0.0
      %1304 = vmatpush.msra.mxu0 0.0
      %1305 = vmatpush.msra.mxu0 0.0
      %1306 = vmatpush.msra.mxu0 0.0
      %1307 = vmatpush.msra.mxu0 %v1157
      %1308 = vmatmul.f32.gmra.mxu0 %v1250
      %v1309 = vpop.f32.mrf.mxu0
      %v1310 = vadd.f32 0.0, %v1309
      %1311 = vdwg.mxu0
      %v1312 = vld [vmem:[%s192] sm:$0xff]
      %v1313 = vld [vmem:[%s192 + $0x8] sm:$0xff]
      %v1314 = vld [vmem:[%s192 + $0x10] sm:$0xff]
      %v1315 = vld [vmem:[%s192 + $0x18] sm:$0xff]
      %v1316 = vld [vmem:[%s192 + $0x20] sm:$0xff]
      %v1317 = vld [vmem:[%s192 + $0x28] sm:$0xff]
      %1324 = vrot.lane.b32.xlu0 %v1107, 19
      %v1325 = vpop.permute.xlu0 %1324
      %1326 = vrot.lane.b32.xlu0 %v1127, 19
      %v1327 = vpop.permute.xlu0 %1326
      %1328 = vrot.lane.b32.xlu0 %v1147, 19
      %v1329 = vpop.permute.xlu0 %1328
      %1330 = vrot.lane.b32.xlu0 %v1270, 19
      %v1331 = vpop.permute.xlu0 %1330
      %1332 = vrot.lane.b32.xlu0 %v1290, 19
      %v1333 = vpop.permute.xlu0 %1332
      %1334 = vrot.lane.b32.xlu0 %v1310, 19
      %v1335 = vpop.permute.xlu0 %1334
      %vm1336 = vcmask 154624
      %v1337 = vsel %vm1336, %v1325, %v1327
      %v1338 = vsel %vm1336, %v1327, %v1329
      %v1339 = vsel %vm1336, %v1331, %v1333
      %v1340 = vsel %vm1336, %v1333, %v1335
      %v1347 = vadd.f32 %v1312, %v1325
      %v1348 = vadd.f32 %v1313, %v1337
      %v1349 = vadd.f32 %v1314, %v1338
      %v1350 = vadd.f32 %v1315, %v1331
      %v1351 = vadd.f32 %v1316, %v1339
      %v1352 = vadd.f32 %v1317, %v1340
      %1359 = vrot.lane.b32.xlu0 %v1347, 109
      %v1360 = vpop.permute.xlu0 %1359
      %1361 = vrot.lane.b32.xlu0 %v1348, 109
      %v1362 = vpop.permute.xlu0 %1361
      %1363 = vrot.lane.b32.xlu0 %v1349, 109
      %v1364 = vpop.permute.xlu0 %1363
      %1365 = vrot.lane.b32.xlu0 %v1350, 109
      %v1366 = vpop.permute.xlu0 %1365
      %1367 = vrot.lane.b32.xlu0 %v1351, 109
      %v1368 = vpop.permute.xlu0 %1367
      %1369 = vrot.lane.b32.xlu0 %v1352, 109
      %v1370 = vpop.permute.xlu0 %1369
      %v1371 = vsel %vm473, %v1360, %v1362
      %v1372 = vsel %vm473, %v1362, %v1364
      %v1373 = vsel %vm473, %v1366, %v1368
      %v1374 = vsel %vm473, %v1368, %v1370
      %v1381 = vadd.f32 %v1371, %v1372
      %v1382 = vsel %vm321, %v1364, 0.0
      %v1383 = vadd.f32 %v1381, %v1382
      %1384 = vadd.xlane.f32.xlu0 %v1383
      %v1385 = vpop.xlane.xlu0 %1384
      %v1386 = vadd.f32 %v1373, %v1374
      %v1387 = vsel %vm321, %v1370, 0.0
      %v1388 = vadd.f32 %v1386, %v1387
      %1389 = vadd.xlane.f32.xlu0 %v1388
      %v1390 = vpop.xlane.xlu0 %1389
      %v1391 = vmul.f32 %v1385, 0.00390625
      %v1392 = vmul.f32 %v1390, 0.00390625
      %v1393 = vmul.f32 %v1347, %v1347
      %v1394 = vmul.f32 %v1348, %v1348
      %v1395 = vmul.f32 %v1349, %v1349
      %v1396 = vmul.f32 %v1350, %v1350
      %v1397 = vmul.f32 %v1351, %v1351
      %v1398 = vmul.f32 %v1352, %v1352
      %1405 = vrot.lane.b32.xlu0 %v1393, 109
      %v1406 = vpop.permute.xlu0 %1405
      %1407 = vrot.lane.b32.xlu0 %v1394, 109
      %v1408 = vpop.permute.xlu0 %1407
      %1409 = vrot.lane.b32.xlu0 %v1395, 109
      %v1410 = vpop.permute.xlu0 %1409
      %1411 = vrot.lane.b32.xlu0 %v1396, 109
      %v1412 = vpop.permute.xlu0 %1411
      %1413 = vrot.lane.b32.xlu0 %v1397, 109
      %v1414 = vpop.permute.xlu0 %1413
      %1415 = vrot.lane.b32.xlu0 %v1398, 109
      %v1416 = vpop.permute.xlu0 %1415
      %v1417 = vsel %vm473, %v1406, %v1408
      %v1418 = vsel %vm473, %v1408, %v1410
      %v1419 = vsel %vm473, %v1412, %v1414
      %v1420 = vsel %vm473, %v1414, %v1416
      %v1427 = vadd.f32 %v1417, %v1418
      %v1428 = vsel %vm321, %v1410, 0.0
      %v1429 = vadd.f32 %v1427, %v1428
      %1430 = vadd.xlane.f32.xlu0 %v1429
      %v1431 = vpop.xlane.xlu0 %1430
      %v1432 = vadd.f32 %v1419, %v1420
      %v1433 = vsel %vm321, %v1416, 0.0
      %v1434 = vadd.f32 %v1432, %v1433
      %1435 = vadd.xlane.f32.xlu0 %v1434
      %v1436 = vpop.xlane.xlu0 %1435
      %v1437 = vmul.f32 %v1431, 0.00390625
      %v1438 = vmul.f32 %v1436, 0.00390625
      %v1439 = vmul.f32 %v1391, %v1391
      %v1440 = vmul.f32 %v1392, %v1392
      %v1441 = vsub.f32 %v1437, %v1439
      %v1442 = vsub.f32 %v1438, %v1440
      %v1443 = vsub.f32 %v1347, %v1391
      %v1444 = vsub.f32 %v1348, %v1391
      %v1445 = vsub.f32 %v1349, %v1391
      %v1446 = vsub.f32 %v1350, %v1392
      %v1447 = vsub.f32 %v1351, %v1392
      %v1448 = vsub.f32 %v1352, %v1392
      %v1449 = vadd.f32 %v1441, 1e-05
      %v1450 = vadd.f32 %v1442, 1e-05
      %v1451 = vrsqrt.pop %v1449
      %v1452 = vmul.f32 %v1451, %v1449
      %v1453 = vmul.f32 %v1452, %v1451
      %v1454 = vmul.f32 0.5, %v1453
      %v1455 = vsub.f32 1.5, %v1454
      %v1456 = vmul.f32 %v1451, %v1455
      %vm1457 = vweird.f32 %v1449
      %vm1458 = vweird.f32 %v1451
      %vm1459 = vmor %vm1457, %vm1458
      %v1460 = vsel %vm1459, %v1451, %v1456
      %v1461 = vrsqrt.pop %v1450
      %v1462 = vmul.f32 %v1461, %v1450
      %v1463 = vmul.f32 %v1462, %v1461
      %v1464 = vmul.f32 0.5, %v1463
      %v1465 = vsub.f32 1.5, %v1464
      %v1466 = vmul.f32 %v1461, %v1465
      %vm1467 = vweird.f32 %v1450
      %vm1468 = vweird.f32 %v1461
      %vm1469 = vmor %vm1467, %vm1468
      %v1470 = vsel %vm1469, %v1461, %v1466
      %v1471 = vmul.f32 %v1443, %v1460
      %v1472 = vmul.f32 %v1444, %v1460
      %v1473 = vmul.f32 %v1445, %v1460
      %v1474 = vmul.f32 %v1446, %v1470
      %v1475 = vmul.f32 %v1447, %v1470
      %v1476 = vmul.f32 %v1448, %v1470
      %v1477 = vld [vmem:[%s2] sm:$0xff]
      %v1478 = vld [vmem:[%s2 + $0x8] sm:$0xff]
      %1480 = vset.pattern.permute.xlu0 0
      %1481 = vperm.xlu0 %1480, %v1477
      %v1482 = vpop.permute.xlu0 %1481
      %1485 = vset.pattern.permute.xlu0 0
      %1486 = vperm.xlu0 %1485, %v1478
      %v1487 = vpop.permute.xlu0 %1486
      %v1489 = vmul.f32 %v1471, %v1482
      %v1490 = vmul.f32 %v1472, %v1482
      %v1491 = vmul.f32 %v1473, %v1482
      %v1492 = vmul.f32 %v1474, %v1487
      %v1493 = vmul.f32 %v1475, %v1487
      %v1494 = vmul.f32 %v1476, %v1487
      %v1495 = vld [vmem:[%s3] sm:$0xff]
      %v1496 = vld [vmem:[%s3 + $0x8] sm:$0xff]
      %1498 = vset.pattern.permute.xlu0 0
      %1499 = vperm.xlu0 %1498, %v1495
      %v1500 = vpop.permute.xlu0 %1499
      %1503 = vset.pattern.permute.xlu0 0
      %1504 = vperm.xlu0 %1503, %v1496
      %v1505 = vpop.permute.xlu0 %1504
      %v1507 = vadd.f32 %v1489, %v1500
      %v1508 = vadd.f32 %v1490, %v1500
      %v1509 = vadd.f32 %v1491, %v1500
      %v1510 = vadd.f32 %v1492, %v1505
      %v1511 = vadd.f32 %v1493, %v1505
      %v1512 = vadd.f32 %v1494, %v1505
      %1519 = vrot.lane.b32.xlu0 %v1507, 109
      %v1520 = vpop.permute.xlu0 %1519
      %1521 = vrot.lane.b32.xlu0 %v1508, 109
      %v1522 = vpop.permute.xlu0 %1521
      %1523 = vrot.lane.b32.xlu0 %v1509, 109
      %v1524 = vpop.permute.xlu0 %1523
      %1525 = vrot.lane.b32.xlu0 %v1510, 109
      %v1526 = vpop.permute.xlu0 %1525
      %1527 = vrot.lane.b32.xlu0 %v1511, 109
      %v1528 = vpop.permute.xlu0 %1527
      %1529 = vrot.lane.b32.xlu0 %v1512, 109
      %v1530 = vpop.permute.xlu0 %1529
      %v1531 = vsel %vm473, %v1520, %v1522
      %v1532 = vsel %vm473, %v1522, %v1524
      %v1533 = vsel %vm473, %v1526, %v1528
      %v1534 = vsel %vm473, %v1528, %v1530
      %1541 = vst [vmem:[%s197] sm:$0xff] %v1531
      %1542 = vst [vmem:[%s197 + $0x8] sm:$0xff] %v1532
      %1543 = vst.msk [vmem:[%s197 + $0x10] sm:$0xff] %vm321, %v1524
      %1544 = vst [vmem:[%s197 + $0x18] sm:$0xff] %v1533
      %1545 = vst [vmem:[%s197 + $0x20] sm:$0xff] %v1534
      %1546 = vst.msk [vmem:[%s197 + $0x28] sm:$0xff] %vm321, %v1530
      %p1547 = scmp.lt.s32.totalorder %s15, 1
      %s1548 = scalar_select %p1547, %s15, 1
      %s1549 = smul.addr %s1548, 6
      %s1550 = smul.addr %s1549, 8
      %s1551 = scalar_lea.vmem %s4, %s1550
      // Predicated region
      $region37: #{self_attention_forward.1} parent=35 // pred_check
        %p1552 = pneg %p122
      $region38: #{self_attention_forward.1} parent=35 // pred_check_branch
        %1554 = sbr.rel (%p1552) target = $region40
      $region39: #{self_attention_forward.1} parent=35 // pred_region
        _
      $region40: #{self_attention_forward.1} parent=35 // pred_fallthru
        _
    $region36: #{self_attention_forward.1} parent=5 // pred_fallthru
      _
    %p1555 = scmp.le.s32.totalorder 2, %s10
    // Predicated region
    $region41: #{self_attention_forward.1} parent=5 // pred_check
      %p1556 = pneg %p1555
    $region42: #{self_attention_forward.1} parent=5 // pred_check_branch
      %1558 = sbr.rel (%p1556) target = $region44
    $region43: #{self_attention_forward.1} parent=5 // pred_region
      %s1559 = ssub.s32 %s10, 2
      // Predicated region
      $region45: #{self_attention_forward.1} parent=43 // pred_check
        %p1560 = pneg %p128
      $region46: #{self_attention_forward.1} parent=43 // pred_check_branch
        %1562 = sbr.rel (%p1560) target = $region48
      $region47: #{self_attention_forward.1} parent=43 // pred_region
        %p1563 = scmp.lt.s32.totalorder %s16, 1
        %s1564 = scalar_select %p1563, %s16, 1
        %s1565 = smul.addr %s1564, 6
        %s1566 = smul.addr %s1565, 8
        %s1567 = scalar_lea.vmem %s4, %s1566
      $region48: #{self_attention_forward.1} parent=43 // pred_fallthru
        _
    $region44: #{self_attention_forward.1} parent=5 // pred_fallthru
      _
  $region6: #{self_attention_forward.1} parent=0 // loop_footer
    %s14 = sadd.s32 1, %s10
  $region7: #{self_attention_forward.1} parent=0 // loop_footer_branch
    %9 = sbr.rel target = $region3
  $region8: #{self_attention_forward.1} parent=0 // loop_exit
    _

</llo_original>
